<compile_context>
chip_gen: v7x
topology: tpu7x:2x2x1
jax: 0.10.0
libtpu: 0.0.40
codegen_flags: <defaults>
</compile_context>

<pallas_src>
import math
import jax
import jax.numpy as jnp
from jax.experimental import pallas as pl
from jax.experimental.pallas import tpu as pltpu

# ----------------------------- model config (small) -----------------------------
VOCAB = 100
D_MODEL = 32
N_HEADS = 4
D_HEAD = D_MODEL // N_HEADS
D_FF = 64
N_LAYERS = 2
MAX_LEN = 16
PAD_IDX = 0
NUM_CLASSES = 3
BATCH = 2
SEQ = 8
EPS = 1e-5

LANES = 128

# --- global slab (f32) row layout: scaled token table | pos table | final-LN | classifier ---
VOCAB_PAD = ((VOCAB + LANES - 1) // LANES) * LANES      # 128: round K of the one-hot matmul
R_POS = VOCAB_PAD
R_LNF = R_POS + MAX_LEN
R_CLSW = R_LNF + 2
R_CLSB = R_CLSW + D_MODEL
G_ROWS = R_CLSB + 1

# --- per-layer weight slab row layout (offsets are multiples of 16 -> bf16 sublane tiles) ---
RW_QKV = 0
RW_W1 = D_MODEL
RW_W2 = 2 * D_MODEL
RW_WO = 2 * D_MODEL + D_FF
W_ROWS = RW_WO + D_MODEL                                # 160


# ----------------------------- shared math helpers -----------------------------
def _layer_norm(x, w, b):
    mu = jnp.mean(x, axis=-1, keepdims=True)
    var = jnp.mean((x - mu) ** 2, axis=-1, keepdims=True)
    return (x - mu) * jax.lax.rsqrt(var + EPS) * w + b


def _gelu(x):
    # tanh approximation (identical form in the pure-JAX reference below).
    # TODO(synk): PyTorch nn.GELU defaults to the exact erf form; delta is ~1e-3 at these scales.
    c = math.sqrt(2.0 / math.pi)
    return 0.5 * x * (1.0 + jnp.tanh(c * (x + 0.044715 * x ** 3)))


# ----------------------------- fused transformer kernel -----------------------------
def fused_transformer_kernel(ids_ref, mask_ref, gslab_ref, wbig_ref, vec_ref, out_ref):
    cdt = wbig_ref.dtype                     # MXU operand dtype (bf16 on v6e/v7x, f32 on v5e)
    f32 = jnp.float32
    BS = BATCH * SEQ

    # ---- token embedding: one-hot matmul (sqrt(d_model) already folded into the table) ----
    ids = ids_ref[...]                                                       # (BS, 1) int32
    onehot = (ids == jax.lax.broadcasted_iota(jnp.int32, (BS, VOCAB_PAD), 1)).astype(cdt)
    tok_tbl = gslab_ref[0:VOCAB_PAD, 0:D_MODEL].astype(cdt)                  # (VOCAB_PAD, D)
    x = jnp.dot(onehot, tok_tbl, preferred_element_type=f32)                 # (BS, D)

    # learned positional embedding (first SEQ rows, tiled over batch); dropout_emb = identity
    pos = gslab_ref[R_POS:R_POS + SEQ, 0:D_MODEL]                            # (S, D)
    x = x + jnp.concatenate([pos] * BATCH, axis=0)

    # ---- additive attention bias: block-diag over batch + key-padding, built in-kernel ----
    mask = mask_ref[...]                                                     # (1, BS) int32
    qpos = jax.lax.broadcasted_iota(jnp.int32, (BS, BS), 0)
    kpos = jax.lax.broadcasted_iota(jnp.int32, (BS, BS), 1)
    if SEQ & (SEQ - 1) == 0:                       # power-of-two seq -> shift, no integer div
        sh = SEQ.bit_length() - 1
        qb, kb = jnp.right_shift(qpos, sh), jnp.right_shift(kpos, sh)
    else:
        qb, kb = qpos // SEQ, kpos // SEQ
    bias = jnp.where((qb == kb) & (mask != 0), 0.0, -1e9).astype(f32)        # (BS, BS)

    # ---- transformer layers (static unroll) ----
    for l in range(N_LAYERS):
        wqkv = wbig_ref[l, RW_QKV:RW_QKV + D_MODEL, 0:3 * D_MODEL]           # (D, 3D) scale-folded
        w1 = wbig_ref[l, RW_W1:RW_W1 + D_MODEL, 0:D_FF]                      # (D, F)
        w2 = wbig_ref[l, RW_W2:RW_W2 + D_FF, 0:D_MODEL]                      # (F, D)
        wo = wbig_ref[l, RW_WO:RW_WO + D_MODEL, 0:D_MODEL]                   # (D, D)
        vv = vec_ref[l]                                                      # (8, 128) f32
        bqkv = vv[0:1, 0:3 * D_MODEL]
        bo = vv[1:2, 0:D_MODEL]
        ln1w, ln1b = vv[2:3, 0:D_MODEL], vv[3:4, 0:D_MODEL]
        b1 = vv[4:5, 0:D_FF]
        b2 = vv[5:6, 0:D_MODEL]
        ln2w, ln2b = vv[6:7, 0:D_MODEL], vv[7:8, 0:D_MODEL]

        # fused Q|K|V projection: one (BS, D) @ (D, 3D) matmul, f32 accumulation
        qkv = jnp.dot(x.astype(cdt), wqkv.astype(cdt),
                      preferred_element_type=f32) + bqkv                     # (BS, 3D)

        # TODO(synk): per-head 8-lane slices of qkv remain (a head-major repack would trade the
        # single fused projection for 12 tiny MXU pushes, which costs more at these sizes).
        hv_parts = []
        for h in range(N_HEADS):                 # static unroll over heads
            lo = h * D_HEAD
            qs = qkv[:, lo:lo + D_HEAD].astype(cdt)
            ks = qkv[:, D_MODEL + lo:D_MODEL + lo + D_HEAD].astype(cdt)
            vs = qkv[:, 2 * D_MODEL + lo:2 * D_MODEL + lo + D_HEAD].astype(cdt)
            # scores over all B*S keys; cross-batch / padded keys get -1e9 from `bias`;
            # 1/sqrt(d_head) already folded into Wq/bq at pack time.
            s = jax.lax.dot_general(qs, ks, (((1,), (1,)), ((), ())),
                                    preferred_element_type=f32) + bias
            s = s - jnp.max(s, axis=-1, keepdims=True)
            p = jnp.exp(s)
            p = p * pl.reciprocal(jnp.sum(p, axis=-1, keepdims=True), approx=True)
            hv_parts.append(jnp.dot(p.astype(cdt), vs, preferred_element_type=f32))
        hv = jnp.concatenate(hv_parts, axis=-1)                              # (BS, D)

        attn = jnp.dot(hv.astype(cdt), wo.astype(cdt),
                       preferred_element_type=f32) + bo                      # single Wo matmul
        h1 = _layer_norm(x + attn, ln1w, ln1b)                               # add & LN1 (f32)

        ff = jnp.dot(h1.astype(cdt), w1.astype(cdt), preferred_element_type=f32) + b1
        ff = _gelu(ff)
        ff = jnp.dot(ff.astype(cdt), w2.astype(cdt), preferred_element_type=f32) + b2
        x = _layer_norm(h1 + ff, ln2w, ln2b)                                 # add & LN2 (f32)

    # ---- final norm + classifier on the CLS rows only (row b*SEQ of each batch element) ----
    x_cls = jnp.concatenate([x[b * SEQ:b * SEQ + 1, :] for b in range(BATCH)], axis=0)  # (B, D)
    lnfw = gslab_ref[R_LNF:R_LNF + 1, 0:D_MODEL]
    lnfb = gslab_ref[R_LNF + 1:R_LNF + 2, 0:D_MODEL]
    cls_w = gslab_ref[R_CLSW:R_CLSW + D_MODEL, 0:NUM_CLASSES]
    cls_b = gslab_ref[R_CLSB:R_CLSB + 1, 0:NUM_CLASSES]
    xn = _layer_norm(x_cls, lnfw, lnfb)
    out_ref[...] = (jnp.dot(xn.astype(cdt), cls_w.astype(cdt),
                            preferred_element_type=f32) + cls_b).astype(out_ref.dtype)


# ----------------------------- parameter packing (done ONCE, outside jit) -----------------------------
def pick_compute_dtype():
    """bf16 MXU operands on v6e/v7x (and newer); keep f32 end-to-end on v5e (no bf16 VPU/EUP)."""
    try:
        kind = jax.devices()[0].device_kind.lower()
    except Exception:
        return jnp.float32
    return jnp.float32 if "v5" in kind else jnp.bfloat16


def pack_params(params, compute_dtype=jnp.float32):
    def pad_lanes(a):
        return jnp.pad(a, ((0, 0), (0, LANES - a.shape[1])))

    # ---- global f32 slab: scaled token table (padded to VOCAB_PAD rows), pos, final LN, cls ----
    tok = params["tok_emb"] * math.sqrt(D_MODEL)                     # fold sqrt(d_model) scale
    tok = jnp.pad(tok, ((0, VOCAB_PAD - VOCAB), (0, 0)))
    lnf = jnp.concatenate([params["fn_w"], params["fn_b"]], axis=0)
    gslab = jnp.concatenate(
        [pad_lanes(tok), pad_lanes(params["pos_emb"]), pad_lanes(lnf),
         pad_lanes(params["cls_w"]), pad_lanes(params["cls_b"])],
        axis=0).astype(jnp.float32)
    assert gslab.shape == (G_ROWS, LANES)

    # ---- per-layer slabs; fold 1/sqrt(d_head) attention scale into Wq / bq ----
    scale = 1.0 / math.sqrt(D_HEAD)
    wblocks, vblocks = [], []
    for (wq, bq, wk, bk, wv, bv, wo, bo, l1w, l1b, w1, b1, w2, b2, l2w, l2b) in params["layers"]:
        wqkv = jnp.concatenate([wq * scale, wk, wv], axis=1)          # (D, 3D)
        bqkv = jnp.concatenate([bq * scale, bk, bv], axis=1)          # (1, 3D)
        wblocks.append(jnp.concatenate(
            [pad_lanes(wqkv), pad_lanes(w1), pad_lanes(w2), pad_lanes(wo)], axis=0))
        vblocks.append(jnp.concatenate(
            [pad_lanes(bqkv), pad_lanes(bo), pad_lanes(l1w), pad_lanes(l1b),
             pad_lanes(b1), pad_lanes(b2), pad_lanes(l2w), pad_lanes(l2b)], axis=0))
    wbig = jnp.stack(wblocks).astype(compute_dtype)                   # (L, 160, 128)
    vslab = jnp.stack(vblocks).astype(jnp.float32)                    # (L, 8, 128)
    assert wbig.shape == (N_LAYERS, W_ROWS, LANES)
    return gslab, wbig, vslab


# ----------------------------- pallas forward -----------------------------
def _forward_impl(input_ids, attention_mask, gslab, wbig, vslab):
    B, S = input_ids.shape
    assert (B, S) == (BATCH, SEQ)
    ids2d = input_ids.reshape(B * S, 1).astype(jnp.int32)       # tokens along sublanes
    mask2d = attention_mask.reshape(1, B * S).astype(jnp.int32)  # keys along lanes
    vspec = pl.BlockSpec(memory_space=pltpu.MemorySpace.VMEM)    # full array, no grid/pipeline
    return pl.pallas_call(
        fused_transformer_kernel,
        out_shape=jax.ShapeDtypeStruct((B, NUM_CLASSES), jnp.float32),
        in_specs=[vspec] * 5,
        out_specs=vspec,
    )(ids2d, mask2d, gslab, wbig, vslab)


forward_pallas = jax.jit(_forward_impl)


# ----------------------------- parameter init (deterministic) -----------------------------
def init_params(key):
    ks = iter(jax.random.split(key, 8 + N_LAYERS * 16))

    def nrm(shape, scale=0.02):
        return jax.random.normal(next(ks), shape, jnp.float32) * scale

    tok_emb = nrm((VOCAB, D_MODEL))
    tok_emb = tok_emb.at[PAD_IDX].set(0.0)           # padding_idx row is zero
    pos_emb = nrm((MAX_LEN, D_MODEL))

    layers = []
    for _ in range(N_LAYERS):
        layers.append((
            nrm((D_MODEL, D_MODEL)), nrm((1, D_MODEL)),     # Wq, bq
            nrm((D_MODEL, D_MODEL)), nrm((1, D_MODEL)),     # Wk, bk
            nrm((D_MODEL, D_MODEL)), nrm((1, D_MODEL)),     # Wv, bv
            nrm((D_MODEL, D_MODEL)), nrm((1, D_MODEL)),     # Wo, bo
            jnp.ones((1, D_MODEL), jnp.float32), jnp.zeros((1, D_MODEL), jnp.float32),  # LN1
            nrm((D_MODEL, D_FF)), nrm((1, D_FF)),           # FFN W1, b1
            nrm((D_FF, D_MODEL)), nrm((1, D_MODEL)),        # FFN W2, b2
            jnp.ones((1, D_MODEL), jnp.float32), jnp.zeros((1, D_MODEL), jnp.float32),  # LN2
        ))

    return dict(
        tok_emb=tok_emb,
        pos_emb=pos_emb,
        layers=layers,
        fn_w=jnp.ones((1, D_MODEL), jnp.float32),
        fn_b=jnp.zeros((1, D_MODEL), jnp.float32),
        cls_w=nrm((D_MODEL, NUM_CLASSES)),
        cls_b=nrm((1, NUM_CLASSES)),
    )


# ----------------------------- pure-JAX reference -----------------------------
def forward_ref(params, input_ids, attention_mask):
    B, S = input_ids.shape
    x = params["tok_emb"][input_ids] * math.sqrt(D_MODEL)
    x = x + params["pos_emb"][jnp.arange(S)][None, :, :]
    bias = jnp.where(attention_mask == 0, -1e9, 0.0).astype(jnp.float32)[:, None, :]  # (B,1,S)
    for (wq, bq, wk, bk, wv, bv, wo, bo, l1w, l1b, w1, b1, w2, b2, l2w, l2b) in params["layers"]:
        q = x @ wq + bq
        k = x @ wk + bk
        v = x @ wv + bv
        outs = []
        for h in range(N_HEADS):
            sl = slice(h * D_HEAD, (h + 1) * D_HEAD)
            s = jnp.einsum("bqd,bkd->bqk", q[..., sl], k[..., sl]) / math.sqrt(D_HEAD) + bias
            p = jax.nn.softmax(s, axis=-1)
            outs.append(jnp.einsum("bqk,bkd->bqd", p, v[..., sl]))
        attn = jnp.concatenate(outs, axis=-1) @ wo + bo
        h1 = _layer_norm(x + attn, l1w, l1b)
        ff = _gelu(h1 @ w1 + b1) @ w2 + b2
        x = _layer_norm(h1 + ff, l2w, l2b)
    xn = _layer_norm(x, params["fn_w"], params["fn_b"])
    return xn[:, 0, :] @ params["cls_w"] + params["cls_b"]


# ----------------------------- main -----------------------------
if __name__ == "__main__":
    key = jax.random.PRNGKey(0)
    pkey, ikey = jax.random.split(key)
    params = init_params(pkey)

    input_ids = jax.random.randint(ikey, (BATCH, SEQ), 1, VOCAB, dtype=jnp.int32)
    attention_mask = jnp.ones((BATCH, SEQ), jnp.int32)
    attention_mask = attention_mask.at[1, -2:].set(0)          # pad last 2 tokens of row 1
    input_ids = jnp.where(attention_mask == 0, PAD_IDX, input_ids)

    # one-time packing (outside jit): bf16 MXU weights on v6e/v7x, f32 on v5e
    gslab, wbig, vslab = pack_params(params, pick_compute_dtype())

    logits = forward_pallas(input_ids, attention_mask, gslab, wbig, vslab)
    logits = jax.block_until_ready(logits)

    ref = forward_ref(params, input_ids, attention_mask)
    assert logits.shape == (BATCH, NUM_CLASSES)
    assert bool(jnp.all(jnp.isfinite(logits)))
    assert bool(jnp.allclose(logits, ref, rtol=2e-2, atol=2e-2)), (logits, ref)

    # TODO(synk): MGALayer branch (use_mga=True) has no reference implementation provided; only
    # the standard TransformerLayer path is implemented.
    print("KERNEL_OK")
</pallas_src>

<mosaic_0001>
module attributes {stable_mosaic.version = 11 : i64} {
  func.func @fused_transformer_kernel(%arg0: memref<16x1xi32, #tpu.memory_space<vmem>>, %arg1: memref<1x16xi32, #tpu.memory_space<vmem>>, %arg2: memref<179x128xf32, #tpu.memory_space<vmem>>, %arg3: memref<2x160x128xbf16, #tpu.memory_space<vmem>>, %arg4: memref<2x8x128xf32, #tpu.memory_space<vmem>>, %arg5: memref<2x3xf32, #tpu.memory_space<vmem>>) attributes {dimension_semantics = [], scalar_prefetch = 0 : i64, scratch_operands = 0 : i64, tpu.core_type = #tpu.core_type<tc>} {
    %c0 = arith.constant 0 : index
    %c0_0 = arith.constant 0 : index
    %0 = vector.load %arg0[%c0, %c0_0] : memref<16x1xi32, #tpu.memory_space<vmem>>, vector<16x1xi32>
    %1 = tpu.iota {dimensions = array<i32: 1>} : vector<16x128xi32>
    %2 = vector.broadcast %0 : vector<16x1xi32> to vector<16x128xi32>
    %3 = arith.cmpi eq, %2, %1 : vector<16x128xi32>
    %4 = arith.extui %3 : vector<16x128xi1> to vector<16x128xi32>
    %5 = arith.sitofp %4 : vector<16x128xi32> to vector<16x128xf32>
    %6 = arith.truncf %5 : vector<16x128xf32> to vector<16x128xbf16>
    %c0_1 = arith.constant 0 : index
    %c0_2 = arith.constant 0 : index
    %7 = vector.load %arg2[%c0_1, %c0_2] : memref<179x128xf32, #tpu.memory_space<vmem>>, vector<128x32xf32>
    %8 = arith.truncf %7 : vector<128x32xf32> to vector<128x32xbf16>
    %cst = arith.constant dense<0.000000e+00> : vector<16x32xf32>
    %9 = tpu.matmul %6, %8, %cst {dimension_numbers = #tpu.dot_dimension_numbers<[1], [0], [0], [1], [0, 0, 1, 1], [], []>} : vector<16x128xbf16>, vector<128x32xbf16>, vector<16x32xf32> -> vector<16x32xf32>
    %c128 = arith.constant 128 : index
    %c0_3 = arith.constant 0 : index
    %10 = vector.load %arg2[%c128, %c0_3] : memref<179x128xf32, #tpu.memory_space<vmem>>, vector<8x32xf32>
    %11 = tpu.concatenate %10, %10 in 0 : vector<8x32xf32>, vector<8x32xf32> -> vector<16x32xf32>
    %12 = arith.addf %9, %11 : vector<16x32xf32>
    %c0_4 = arith.constant 0 : index
    %c0_5 = arith.constant 0 : index
    %13 = vector.load %arg1[%c0_4, %c0_5] : memref<1x16xi32, #tpu.memory_space<vmem>>, vector<1x16xi32>
    %14 = tpu.iota {dimensions = array<i32: 0>} : vector<16x16xi32>
    %15 = tpu.iota {dimensions = array<i32: 1>} : vector<16x16xi32>
    %c3_i32 = arith.constant 3 : i32
    %16 = vector.broadcast %c3_i32 : i32 to vector<16x16xi32>
    %17 = arith.shrsi %14, %16 : vector<16x16xi32>
    %c3_i32_6 = arith.constant 3 : i32
    %18 = vector.broadcast %c3_i32_6 : i32 to vector<16x16xi32>
    %19 = arith.shrsi %15, %18 : vector<16x16xi32>
    %20 = arith.cmpi eq, %17, %19 : vector<16x16xi32>
    %c0_i32 = arith.constant 0 : i32
    %21 = vector.broadcast %c0_i32 : i32 to vector<1x16xi32>
    %22 = arith.cmpi ne, %13, %21 : vector<1x16xi32>
    %23 = vector.broadcast %22 : vector<1x16xi1> to vector<16x16xi1>
    %24 = arith.andi %20, %23 : vector<16x16xi1>
    %cst_7 = arith.constant 0.000000e+00 : f32
    %cst_8 = arith.constant -1.000000e+09 : f32
    %25 = vector.broadcast %cst_7 : f32 to vector<16x16xf32>
    %26 = vector.broadcast %cst_8 : f32 to vector<16x16xf32>
    %27 = arith.select %24, %25, %26 : vector<16x16xi1>, vector<16x16xf32>
    %c0_9 = arith.constant 0 : index
    %c0_10 = arith.constant 0 : index
    %c0_11 = arith.constant 0 : index
    %28 = vector.load %arg3[%c0_9, %c0_10, %c0_11] : memref<2x160x128xbf16, #tpu.memory_space<vmem>>, vector<1x32x96xbf16>
    %29 = vector.shape_cast %28 : vector<1x32x96xbf16> to vector<32x96xbf16>
    %c0_12 = arith.constant 0 : index
    %c32 = arith.constant 32 : index
    %c0_13 = arith.constant 0 : index
    %30 = vector.load %arg3[%c0_12, %c32, %c0_13] : memref<2x160x128xbf16, #tpu.memory_space<vmem>>, vector<1x32x64xbf16>
    %31 = vector.shape_cast %30 : vector<1x32x64xbf16> to vector<32x64xbf16>
    %c0_14 = arith.constant 0 : index
    %c64 = arith.constant 64 : index
    %c0_15 = arith.constant 0 : index
    %32 = vector.load %arg3[%c0_14, %c64, %c0_15] : memref<2x160x128xbf16, #tpu.memory_space<vmem>>, vector<1x64x32xbf16>
    %33 = vector.shape_cast %32 : vector<1x64x32xbf16> to vector<64x32xbf16>
    %c0_16 = arith.constant 0 : index
    %c128_17 = arith.constant 128 : index
    %c0_18 = arith.constant 0 : index
    %34 = vector.load %arg3[%c0_16, %c128_17, %c0_18] : memref<2x160x128xbf16, #tpu.memory_space<vmem>>, vector<1x32x32xbf16>
    %35 = vector.shape_cast %34 : vector<1x32x32xbf16> to vector<32x32xbf16>
    %c0_19 = arith.constant 0 : index
    %c0_20 = arith.constant 0 : index
    %c0_21 = arith.constant 0 : index
    %36 = vector.load %arg4[%c0_19, %c0_20, %c0_21] : memref<2x8x128xf32, #tpu.memory_space<vmem>>, vector<1x8x128xf32>
    %37 = vector.shape_cast %36 : vector<1x8x128xf32> to vector<8x128xf32>
    %38 = vector.extract_strided_slice %37 {offsets = [0, 0], sizes = [1, 96], strides = [1, 1]} : vector<8x128xf32> to vector<1x96xf32>
    %39 = vector.extract_strided_slice %37 {offsets = [1, 0], sizes = [1, 32], strides = [1, 1]} : vector<8x128xf32> to vector<1x32xf32>
    %40 = vector.extract_strided_slice %37 {offsets = [2, 0], sizes = [1, 32], strides = [1, 1]} : vector<8x128xf32> to vector<1x32xf32>
    %41 = vector.extract_strided_slice %37 {offsets = [3, 0], sizes = [1, 32], strides = [1, 1]} : vector<8x128xf32> to vector<1x32xf32>
    %42 = vector.extract_strided_slice %37 {offsets = [4, 0], sizes = [1, 64], strides = [1, 1]} : vector<8x128xf32> to vector<1x64xf32>
    %43 = vector.extract_strided_slice %37 {offsets = [5, 0], sizes = [1, 32], strides = [1, 1]} : vector<8x128xf32> to vector<1x32xf32>
    %44 = vector.extract_strided_slice %37 {offsets = [6, 0], sizes = [1, 32], strides = [1, 1]} : vector<8x128xf32> to vector<1x32xf32>
    %45 = vector.extract_strided_slice %37 {offsets = [7, 0], sizes = [1, 32], strides = [1, 1]} : vector<8x128xf32> to vector<1x32xf32>
    %46 = arith.truncf %12 : vector<16x32xf32> to vector<16x32xbf16>
    %cst_22 = arith.constant dense<0.000000e+00> : vector<16x96xf32>
    %47 = tpu.matmul %46, %29, %cst_22 {dimension_numbers = #tpu.dot_dimension_numbers<[1], [0], [0], [1], [0, 0, 1, 1], [], []>} : vector<16x32xbf16>, vector<32x96xbf16>, vector<16x96xf32> -> vector<16x96xf32>
    %48 = vector.broadcast %38 : vector<1x96xf32> to vector<16x96xf32>
    %49 = arith.addf %47, %48 : vector<16x96xf32>
    %50 = vector.extract_strided_slice %49 {offsets = [0, 0], sizes = [16, 8], strides = [1, 1]} : vector<16x96xf32> to vector<16x8xf32>
    %51 = arith.truncf %50 : vector<16x8xf32> to vector<16x8xbf16>
    %52 = vector.extract_strided_slice %49 {offsets = [0, 32], sizes = [16, 8], strides = [1, 1]} : vector<16x96xf32> to vector<16x8xf32>
    %53 = arith.truncf %52 : vector<16x8xf32> to vector<16x8xbf16>
    %54 = vector.extract_strided_slice %49 {offsets = [0, 64], sizes = [16, 8], strides = [1, 1]} : vector<16x96xf32> to vector<16x8xf32>
    %55 = arith.truncf %54 : vector<16x8xf32> to vector<16x8xbf16>
    %cst_23 = arith.constant dense<0.000000e+00> : vector<16x16xf32>
    %56 = tpu.matmul %51, %53, %cst_23 {dimension_numbers = #tpu.dot_dimension_numbers<[1], [1], [0], [0], [0, 0, 1, 0], [], []>} : vector<16x8xbf16>, vector<16x8xbf16>, vector<16x16xf32> -> vector<16x16xf32>
    %57 = arith.addf %56, %27 : vector<16x16xf32>
    %cst_24 = arith.constant dense<0xFF800000> : vector<16xf32>
    %58 = vector.multi_reduction <maximumf>, %57, %cst_24 [1] : vector<16x16xf32> to vector<16xf32>
    %59 = vector.shape_cast %58 : vector<16xf32> to vector<16x1xf32>
    %60 = vector.broadcast %59 : vector<16x1xf32> to vector<16x16xf32>
    %61 = arith.subf %57, %60 : vector<16x16xf32>
    %62 = math.exp %61 : vector<16x16xf32>
    %cst_25 = arith.constant dense<0.000000e+00> : vector<16xf32>
    %63 = vector.multi_reduction <add>, %62, %cst_25 [1] : vector<16x16xf32> to vector<16xf32>
    %64 = vector.shape_cast %63 : vector<16xf32> to vector<16x1xf32>
    %65 = tpu.reciprocal %64 {approx = true} : vector<16x1xf32> -> vector<16x1xf32>
    %66 = vector.broadcast %65 : vector<16x1xf32> to vector<16x16xf32>
    %67 = arith.mulf %62, %66 : vector<16x16xf32>
    %68 = arith.truncf %67 : vector<16x16xf32> to vector<16x16xbf16>
    %cst_26 = arith.constant dense<0.000000e+00> : vector<16x8xf32>
    %69 = tpu.matmul %68, %55, %cst_26 {dimension_numbers = #tpu.dot_dimension_numbers<[1], [0], [0], [1], [0, 0, 1, 1], [], []>} : vector<16x16xbf16>, vector<16x8xbf16>, vector<16x8xf32> -> vector<16x8xf32>
    %70 = vector.extract_strided_slice %49 {offsets = [0, 8], sizes = [16, 8], strides = [1, 1]} : vector<16x96xf32> to vector<16x8xf32>
    %71 = arith.truncf %70 : vector<16x8xf32> to vector<16x8xbf16>
    %72 = vector.extract_strided_slice %49 {offsets = [0, 40], sizes = [16, 8], strides = [1, 1]} : vector<16x96xf32> to vector<16x8xf32>
    %73 = arith.truncf %72 : vector<16x8xf32> to vector<16x8xbf16>
    %74 = vector.extract_strided_slice %49 {offsets = [0, 72], sizes = [16, 8], strides = [1, 1]} : vector<16x96xf32> to vector<16x8xf32>
    %75 = arith.truncf %74 : vector<16x8xf32> to vector<16x8xbf16>
    %cst_27 = arith.constant dense<0.000000e+00> : vector<16x16xf32>
    %76 = tpu.matmul %71, %73, %cst_27 {dimension_numbers = #tpu.dot_dimension_numbers<[1], [1], [0], [0], [0, 0, 1, 0], [], []>} : vector<16x8xbf16>, vector<16x8xbf16>, vector<16x16xf32> -> vector<16x16xf32>
    %77 = arith.addf %76, %27 : vector<16x16xf32>
    %cst_28 = arith.constant dense<0xFF800000> : vector<16xf32>
    %78 = vector.multi_reduction <maximumf>, %77, %cst_28 [1] : vector<16x16xf32> to vector<16xf32>
    %79 = vector.shape_cast %78 : vector<16xf32> to vector<16x1xf32>
    %80 = vector.broadcast %79 : vector<16x1xf32> to vector<16x16xf32>
    %81 = arith.subf %77, %80 : vector<16x16xf32>
    %82 = math.exp %81 : vector<16x16xf32>
    %cst_29 = arith.constant dense<0.000000e+00> : vector<16xf32>
    %83 = vector.multi_reduction <add>, %82, %cst_29 [1] : vector<16x16xf32> to vector<16xf32>
    %84 = vector.shape_cast %83 : vector<16xf32> to vector<16x1xf32>
    %85 = tpu.reciprocal %84 {approx = true} : vector<16x1xf32> -> vector<16x1xf32>
    %86 = vector.broadcast %85 : vector<16x1xf32> to vector<16x16xf32>
    %87 = arith.mulf %82, %86 : vector<16x16xf32>
    %88 = arith.truncf %87 : vector<16x16xf32> to vector<16x16xbf16>
    %cst_30 = arith.constant dense<0.000000e+00> : vector<16x8xf32>
    %89 = tpu.matmul %88, %75, %cst_30 {dimension_numbers = #tpu.dot_dimension_numbers<[1], [0], [0], [1], [0, 0, 1, 1], [], []>} : vector<16x16xbf16>, vector<16x8xbf16>, vector<16x8xf32> -> vector<16x8xf32>
    %90 = vector.extract_strided_slice %49 {offsets = [0, 16], sizes = [16, 8], strides = [1, 1]} : vector<16x96xf32> to vector<16x8xf32>
    %91 = arith.truncf %90 : vector<16x8xf32> to vector<16x8xbf16>
    %92 = vector.extract_strided_slice %49 {offsets = [0, 48], sizes = [16, 8], strides = [1, 1]} : vector<16x96xf32> to vector<16x8xf32>
    %93 = arith.truncf %92 : vector<16x8xf32> to vector<16x8xbf16>
    %94 = vector.extract_strided_slice %49 {offsets = [0, 80], sizes = [16, 8], strides = [1, 1]} : vector<16x96xf32> to vector<16x8xf32>
    %95 = arith.truncf %94 : vector<16x8xf32> to vector<16x8xbf16>
    %cst_31 = arith.constant dense<0.000000e+00> : vector<16x16xf32>
    %96 = tpu.matmul %91, %93, %cst_31 {dimension_numbers = #tpu.dot_dimension_numbers<[1], [1], [0], [0], [0, 0, 1, 0], [], []>} : vector<16x8xbf16>, vector<16x8xbf16>, vector<16x16xf32> -> vector<16x16xf32>
    %97 = arith.addf %96, %27 : vector<16x16xf32>
    %cst_32 = arith.constant dense<0xFF800000> : vector<16xf32>
    %98 = vector.multi_reduction <maximumf>, %97, %cst_32 [1] : vector<16x16xf32> to vector<16xf32>
    %99 = vector.shape_cast %98 : vector<16xf32> to vector<16x1xf32>
    %100 = vector.broadcast %99 : vector<16x1xf32> to vector<16x16xf32>
    %101 = arith.subf %97, %100 : vector<16x16xf32>
    %102 = math.exp %101 : vector<16x16xf32>
    %cst_33 = arith.constant dense<0.000000e+00> : vector<16xf32>
    %103 = vector.multi_reduction <add>, %102, %cst_33 [1] : vector<16x16xf32> to vector<16xf32>
    %104 = vector.shape_cast %103 : vector<16xf32> to vector<16x1xf32>
    %105 = tpu.reciprocal %104 {approx = true} : vector<16x1xf32> -> vector<16x1xf32>
    %106 = vector.broadcast %105 : vector<16x1xf32> to vector<16x16xf32>
    %107 = arith.mulf %102, %106 : vector<16x16xf32>
    %108 = arith.truncf %107 : vector<16x16xf32> to vector<16x16xbf16>
    %cst_34 = arith.constant dense<0.000000e+00> : vector<16x8xf32>
    %109 = tpu.matmul %108, %95, %cst_34 {dimension_numbers = #tpu.dot_dimension_numbers<[1], [0], [0], [1], [0, 0, 1, 1], [], []>} : vector<16x16xbf16>, vector<16x8xbf16>, vector<16x8xf32> -> vector<16x8xf32>
    %110 = vector.extract_strided_slice %49 {offsets = [0, 24], sizes = [16, 8], strides = [1, 1]} : vector<16x96xf32> to vector<16x8xf32>
    %111 = arith.truncf %110 : vector<16x8xf32> to vector<16x8xbf16>
    %112 = vector.extract_strided_slice %49 {offsets = [0, 56], sizes = [16, 8], strides = [1, 1]} : vector<16x96xf32> to vector<16x8xf32>
    %113 = arith.truncf %112 : vector<16x8xf32> to vector<16x8xbf16>
    %114 = vector.extract_strided_slice %49 {offsets = [0, 88], sizes = [16, 8], strides = [1, 1]} : vector<16x96xf32> to vector<16x8xf32>
    %115 = arith.truncf %114 : vector<16x8xf32> to vector<16x8xbf16>
    %cst_35 = arith.constant dense<0.000000e+00> : vector<16x16xf32>
    %116 = tpu.matmul %111, %113, %cst_35 {dimension_numbers = #tpu.dot_dimension_numbers<[1], [1], [0], [0], [0, 0, 1, 0], [], []>} : vector<16x8xbf16>, vector<16x8xbf16>, vector<16x16xf32> -> vector<16x16xf32>
    %117 = arith.addf %116, %27 : vector<16x16xf32>
    %cst_36 = arith.constant dense<0xFF800000> : vector<16xf32>
    %118 = vector.multi_reduction <maximumf>, %117, %cst_36 [1] : vector<16x16xf32> to vector<16xf32>
    %119 = vector.shape_cast %118 : vector<16xf32> to vector<16x1xf32>
    %120 = vector.broadcast %119 : vector<16x1xf32> to vector<16x16xf32>
    %121 = arith.subf %117, %120 : vector<16x16xf32>
    %122 = math.exp %121 : vector<16x16xf32>
    %cst_37 = arith.constant dense<0.000000e+00> : vector<16xf32>
    %123 = vector.multi_reduction <add>, %122, %cst_37 [1] : vector<16x16xf32> to vector<16xf32>
    %124 = vector.shape_cast %123 : vector<16xf32> to vector<16x1xf32>
    %125 = tpu.reciprocal %124 {approx = true} : vector<16x1xf32> -> vector<16x1xf32>
    %126 = vector.broadcast %125 : vector<16x1xf32> to vector<16x16xf32>
    %127 = arith.mulf %122, %126 : vector<16x16xf32>
    %128 = arith.truncf %127 : vector<16x16xf32> to vector<16x16xbf16>
    %cst_38 = arith.constant dense<0.000000e+00> : vector<16x8xf32>
    %129 = tpu.matmul %128, %115, %cst_38 {dimension_numbers = #tpu.dot_dimension_numbers<[1], [0], [0], [1], [0, 0, 1, 1], [], []>} : vector<16x16xbf16>, vector<16x8xbf16>, vector<16x8xf32> -> vector<16x8xf32>
    %130 = tpu.concatenate %69, %89, %109, %129 in 1 : vector<16x8xf32>, vector<16x8xf32>, vector<16x8xf32>, vector<16x8xf32> -> vector<16x32xf32>
    %131 = arith.truncf %130 : vector<16x32xf32> to vector<16x32xbf16>
    %cst_39 = arith.constant dense<0.000000e+00> : vector<16x32xf32>
    %132 = tpu.matmul %131, %35, %cst_39 {dimension_numbers = #tpu.dot_dimension_numbers<[1], [0], [0], [1], [0, 0, 1, 1], [], []>} : vector<16x32xbf16>, vector<32x32xbf16>, vector<16x32xf32> -> vector<16x32xf32>
    %133 = vector.broadcast %39 : vector<1x32xf32> to vector<16x32xf32>
    %134 = arith.addf %132, %133 : vector<16x32xf32>
    %135 = arith.addf %12, %134 : vector<16x32xf32>
    %cst_40 = arith.constant dense<0.000000e+00> : vector<16xf32>
    %136 = vector.multi_reduction <add>, %135, %cst_40 [1] : vector<16x32xf32> to vector<16xf32>
    %137 = vector.shape_cast %136 : vector<16xf32> to vector<16x1xf32>
    %cst_41 = arith.constant 3.200000e+01 : f32
    %138 = vector.broadcast %cst_41 : f32 to vector<16x1xf32>
    %139 = arith.divf %137, %138 : vector<16x1xf32>
    %140 = vector.broadcast %139 : vector<16x1xf32> to vector<16x32xf32>
    %141 = arith.subf %135, %140 : vector<16x32xf32>
    %142 = arith.mulf %141, %141 : vector<16x32xf32>
    %cst_42 = arith.constant dense<0.000000e+00> : vector<16xf32>
    %143 = vector.multi_reduction <add>, %142, %cst_42 [1] : vector<16x32xf32> to vector<16xf32>
    %144 = vector.shape_cast %143 : vector<16xf32> to vector<16x1xf32>
    %cst_43 = arith.constant 3.200000e+01 : f32
    %145 = vector.broadcast %cst_43 : f32 to vector<16x1xf32>
    %146 = arith.divf %144, %145 : vector<16x1xf32>
    %147 = vector.broadcast %139 : vector<16x1xf32> to vector<16x32xf32>
    %148 = arith.subf %135, %147 : vector<16x32xf32>
    %cst_44 = arith.constant 9.99999974E-6 : f32
    %149 = vector.broadcast %cst_44 : f32 to vector<16x1xf32>
    %150 = arith.addf %146, %149 : vector<16x1xf32>
    %151 = math.rsqrt %150 : vector<16x1xf32>
    %152 = vector.broadcast %151 : vector<16x1xf32> to vector<16x32xf32>
    %153 = arith.mulf %148, %152 : vector<16x32xf32>
    %154 = vector.broadcast %40 : vector<1x32xf32> to vector<16x32xf32>
    %155 = arith.mulf %153, %154 : vector<16x32xf32>
    %156 = vector.broadcast %41 : vector<1x32xf32> to vector<16x32xf32>
    %157 = arith.addf %155, %156 : vector<16x32xf32>
    %158 = arith.truncf %157 : vector<16x32xf32> to vector<16x32xbf16>
    %cst_45 = arith.constant dense<0.000000e+00> : vector<16x64xf32>
    %159 = tpu.matmul %158, %31, %cst_45 {dimension_numbers = #tpu.dot_dimension_numbers<[1], [0], [0], [1], [0, 0, 1, 1], [], []>} : vector<16x32xbf16>, vector<32x64xbf16>, vector<16x64xf32> -> vector<16x64xf32>
    %160 = vector.broadcast %42 : vector<1x64xf32> to vector<16x64xf32>
    %161 = arith.addf %159, %160 : vector<16x64xf32>
    %cst_46 = arith.constant 5.000000e-01 : f32
    %162 = vector.broadcast %cst_46 : f32 to vector<16x64xf32>
    %163 = arith.mulf %162, %161 : vector<16x64xf32>
    %164 = arith.mulf %161, %161 : vector<16x64xf32>
    %165 = arith.mulf %161, %164 : vector<16x64xf32>
    %cst_47 = arith.constant 4.471500e-02 : f32
    %166 = vector.broadcast %cst_47 : f32 to vector<16x64xf32>
    %167 = arith.mulf %166, %165 : vector<16x64xf32>
    %168 = arith.addf %161, %167 : vector<16x64xf32>
    %cst_48 = arith.constant 0.797884583 : f32
    %169 = vector.broadcast %cst_48 : f32 to vector<16x64xf32>
    %170 = arith.mulf %169, %168 : vector<16x64xf32>
    %171 = math.tanh %170 : vector<16x64xf32>
    %cst_49 = arith.constant 1.000000e+00 : f32
    %172 = vector.broadcast %cst_49 : f32 to vector<16x64xf32>
    %173 = arith.addf %172, %171 : vector<16x64xf32>
    %174 = arith.mulf %163, %173 : vector<16x64xf32>
    %175 = arith.truncf %174 : vector<16x64xf32> to vector<16x64xbf16>
    %cst_50 = arith.constant dense<0.000000e+00> : vector<16x32xf32>
    %176 = tpu.matmul %175, %33, %cst_50 {dimension_numbers = #tpu.dot_dimension_numbers<[1], [0], [0], [1], [0, 0, 1, 1], [], []>} : vector<16x64xbf16>, vector<64x32xbf16>, vector<16x32xf32> -> vector<16x32xf32>
    %177 = vector.broadcast %43 : vector<1x32xf32> to vector<16x32xf32>
    %178 = arith.addf %176, %177 : vector<16x32xf32>
    %179 = arith.addf %157, %178 : vector<16x32xf32>
    %cst_51 = arith.constant dense<0.000000e+00> : vector<16xf32>
    %180 = vector.multi_reduction <add>, %179, %cst_51 [1] : vector<16x32xf32> to vector<16xf32>
    %181 = vector.shape_cast %180 : vector<16xf32> to vector<16x1xf32>
    %cst_52 = arith.constant 3.200000e+01 : f32
    %182 = vector.broadcast %cst_52 : f32 to vector<16x1xf32>
    %183 = arith.divf %181, %182 : vector<16x1xf32>
    %184 = vector.broadcast %183 : vector<16x1xf32> to vector<16x32xf32>
    %185 = arith.subf %179, %184 : vector<16x32xf32>
    %186 = arith.mulf %185, %185 : vector<16x32xf32>
    %cst_53 = arith.constant dense<0.000000e+00> : vector<16xf32>
    %187 = vector.multi_reduction <add>, %186, %cst_53 [1] : vector<16x32xf32> to vector<16xf32>
    %188 = vector.shape_cast %187 : vector<16xf32> to vector<16x1xf32>
    %cst_54 = arith.constant 3.200000e+01 : f32
    %189 = vector.broadcast %cst_54 : f32 to vector<16x1xf32>
    %190 = arith.divf %188, %189 : vector<16x1xf32>
    %191 = vector.broadcast %183 : vector<16x1xf32> to vector<16x32xf32>
    %192 = arith.subf %179, %191 : vector<16x32xf32>
    %cst_55 = arith.constant 9.99999974E-6 : f32
    %193 = vector.broadcast %cst_55 : f32 to vector<16x1xf32>
    %194 = arith.addf %190, %193 : vector<16x1xf32>
    %195 = math.rsqrt %194 : vector<16x1xf32>
    %196 = vector.broadcast %195 : vector<16x1xf32> to vector<16x32xf32>
    %197 = arith.mulf %192, %196 : vector<16x32xf32>
    %198 = vector.broadcast %44 : vector<1x32xf32> to vector<16x32xf32>
    %199 = arith.mulf %197, %198 : vector<16x32xf32>
    %200 = vector.broadcast %45 : vector<1x32xf32> to vector<16x32xf32>
    %201 = arith.addf %199, %200 : vector<16x32xf32>
    %c1 = arith.constant 1 : index
    %c0_56 = arith.constant 0 : index
    %c0_57 = arith.constant 0 : index
    %202 = vector.load %arg3[%c1, %c0_56, %c0_57] : memref<2x160x128xbf16, #tpu.memory_space<vmem>>, vector<1x32x96xbf16>
    %203 = vector.shape_cast %202 : vector<1x32x96xbf16> to vector<32x96xbf16>
    %c1_58 = arith.constant 1 : index
    %c32_59 = arith.constant 32 : index
    %c0_60 = arith.constant 0 : index
    %204 = vector.load %arg3[%c1_58, %c32_59, %c0_60] : memref<2x160x128xbf16, #tpu.memory_space<vmem>>, vector<1x32x64xbf16>
    %205 = vector.shape_cast %204 : vector<1x32x64xbf16> to vector<32x64xbf16>
    %c1_61 = arith.constant 1 : index
    %c64_62 = arith.constant 64 : index
    %c0_63 = arith.constant 0 : index
    %206 = vector.load %arg3[%c1_61, %c64_62, %c0_63] : memref<2x160x128xbf16, #tpu.memory_space<vmem>>, vector<1x64x32xbf16>
    %207 = vector.shape_cast %206 : vector<1x64x32xbf16> to vector<64x32xbf16>
    %c1_64 = arith.constant 1 : index
    %c128_65 = arith.constant 128 : index
    %c0_66 = arith.constant 0 : index
    %208 = vector.load %arg3[%c1_64, %c128_65, %c0_66] : memref<2x160x128xbf16, #tpu.memory_space<vmem>>, vector<1x32x32xbf16>
    %209 = vector.shape_cast %208 : vector<1x32x32xbf16> to vector<32x32xbf16>
    %c1_67 = arith.constant 1 : index
    %c0_68 = arith.constant 0 : index
    %c0_69 = arith.constant 0 : index
    %210 = vector.load %arg4[%c1_67, %c0_68, %c0_69] : memref<2x8x128xf32, #tpu.memory_space<vmem>>, vector<1x8x128xf32>
    %211 = vector.shape_cast %210 : vector<1x8x128xf32> to vector<8x128xf32>
    %212 = vector.extract_strided_slice %211 {offsets = [0, 0], sizes = [1, 96], strides = [1, 1]} : vector<8x128xf32> to vector<1x96xf32>
    %213 = vector.extract_strided_slice %211 {offsets = [1, 0], sizes = [1, 32], strides = [1, 1]} : vector<8x128xf32> to vector<1x32xf32>
    %214 = vector.extract_strided_slice %211 {offsets = [2, 0], sizes = [1, 32], strides = [1, 1]} : vector<8x128xf32> to vector<1x32xf32>
    %215 = vector.extract_strided_slice %211 {offsets = [3, 0], sizes = [1, 32], strides = [1, 1]} : vector<8x128xf32> to vector<1x32xf32>
    %216 = vector.extract_strided_slice %211 {offsets = [4, 0], sizes = [1, 64], strides = [1, 1]} : vector<8x128xf32> to vector<1x64xf32>
    %217 = vector.extract_strided_slice %211 {offsets = [5, 0], sizes = [1, 32], strides = [1, 1]} : vector<8x128xf32> to vector<1x32xf32>
    %218 = vector.extract_strided_slice %211 {offsets = [6, 0], sizes = [1, 32], strides = [1, 1]} : vector<8x128xf32> to vector<1x32xf32>
    %219 = vector.extract_strided_slice %211 {offsets = [7, 0], sizes = [1, 32], strides = [1, 1]} : vector<8x128xf32> to vector<1x32xf32>
    %220 = arith.truncf %201 : vector<16x32xf32> to vector<16x32xbf16>
    %cst_70 = arith.constant dense<0.000000e+00> : vector<16x96xf32>
    %221 = tpu.matmul %220, %203, %cst_70 {dimension_numbers = #tpu.dot_dimension_numbers<[1], [0], [0], [1], [0, 0, 1, 1], [], []>} : vector<16x32xbf16>, vector<32x96xbf16>, vector<16x96xf32> -> vector<16x96xf32>
    %222 = vector.broadcast %212 : vector<1x96xf32> to vector<16x96xf32>
    %223 = arith.addf %221, %222 : vector<16x96xf32>
    %224 = vector.extract_strided_slice %223 {offsets = [0, 0], sizes = [16, 8], strides = [1, 1]} : vector<16x96xf32> to vector<16x8xf32>
    %225 = arith.truncf %224 : vector<16x8xf32> to vector<16x8xbf16>
    %226 = vector.extract_strided_slice %223 {offsets = [0, 32], sizes = [16, 8], strides = [1, 1]} : vector<16x96xf32> to vector<16x8xf32>
    %227 = arith.truncf %226 : vector<16x8xf32> to vector<16x8xbf16>
    %228 = vector.extract_strided_slice %223 {offsets = [0, 64], sizes = [16, 8], strides = [1, 1]} : vector<16x96xf32> to vector<16x8xf32>
    %229 = arith.truncf %228 : vector<16x8xf32> to vector<16x8xbf16>
    %cst_71 = arith.constant dense<0.000000e+00> : vector<16x16xf32>
    %230 = tpu.matmul %225, %227, %cst_71 {dimension_numbers = #tpu.dot_dimension_numbers<[1], [1], [0], [0], [0, 0, 1, 0], [], []>} : vector<16x8xbf16>, vector<16x8xbf16>, vector<16x16xf32> -> vector<16x16xf32>
    %231 = arith.addf %230, %27 : vector<16x16xf32>
    %cst_72 = arith.constant dense<0xFF800000> : vector<16xf32>
    %232 = vector.multi_reduction <maximumf>, %231, %cst_72 [1] : vector<16x16xf32> to vector<16xf32>
    %233 = vector.shape_cast %232 : vector<16xf32> to vector<16x1xf32>
    %234 = vector.broadcast %233 : vector<16x1xf32> to vector<16x16xf32>
    %235 = arith.subf %231, %234 : vector<16x16xf32>
    %236 = math.exp %235 : vector<16x16xf32>
    %cst_73 = arith.constant dense<0.000000e+00> : vector<16xf32>
    %237 = vector.multi_reduction <add>, %236, %cst_73 [1] : vector<16x16xf32> to vector<16xf32>
    %238 = vector.shape_cast %237 : vector<16xf32> to vector<16x1xf32>
    %239 = tpu.reciprocal %238 {approx = true} : vector<16x1xf32> -> vector<16x1xf32>
    %240 = vector.broadcast %239 : vector<16x1xf32> to vector<16x16xf32>
    %241 = arith.mulf %236, %240 : vector<16x16xf32>
    %242 = arith.truncf %241 : vector<16x16xf32> to vector<16x16xbf16>
    %cst_74 = arith.constant dense<0.000000e+00> : vector<16x8xf32>
    %243 = tpu.matmul %242, %229, %cst_74 {dimension_numbers = #tpu.dot_dimension_numbers<[1], [0], [0], [1], [0, 0, 1, 1], [], []>} : vector<16x16xbf16>, vector<16x8xbf16>, vector<16x8xf32> -> vector<16x8xf32>
    %244 = vector.extract_strided_slice %223 {offsets = [0, 8], sizes = [16, 8], strides = [1, 1]} : vector<16x96xf32> to vector<16x8xf32>
    %245 = arith.truncf %244 : vector<16x8xf32> to vector<16x8xbf16>
    %246 = vector.extract_strided_slice %223 {offsets = [0, 40], sizes = [16, 8], strides = [1, 1]} : vector<16x96xf32> to vector<16x8xf32>
    %247 = arith.truncf %246 : vector<16x8xf32> to vector<16x8xbf16>
    %248 = vector.extract_strided_slice %223 {offsets = [0, 72], sizes = [16, 8], strides = [1, 1]} : vector<16x96xf32> to vector<16x8xf32>
    %249 = arith.truncf %248 : vector<16x8xf32> to vector<16x8xbf16>
    %cst_75 = arith.constant dense<0.000000e+00> : vector<16x16xf32>
    %250 = tpu.matmul %245, %247, %cst_75 {dimension_numbers = #tpu.dot_dimension_numbers<[1], [1], [0], [0], [0, 0, 1, 0], [], []>} : vector<16x8xbf16>, vector<16x8xbf16>, vector<16x16xf32> -> vector<16x16xf32>
    %251 = arith.addf %250, %27 : vector<16x16xf32>
    %cst_76 = arith.constant dense<0xFF800000> : vector<16xf32>
    %252 = vector.multi_reduction <maximumf>, %251, %cst_76 [1] : vector<16x16xf32> to vector<16xf32>
    %253 = vector.shape_cast %252 : vector<16xf32> to vector<16x1xf32>
    %254 = vector.broadcast %253 : vector<16x1xf32> to vector<16x16xf32>
    %255 = arith.subf %251, %254 : vector<16x16xf32>
    %256 = math.exp %255 : vector<16x16xf32>
    %cst_77 = arith.constant dense<0.000000e+00> : vector<16xf32>
    %257 = vector.multi_reduction <add>, %256, %cst_77 [1] : vector<16x16xf32> to vector<16xf32>
    %258 = vector.shape_cast %257 : vector<16xf32> to vector<16x1xf32>
    %259 = tpu.reciprocal %258 {approx = true} : vector<16x1xf32> -> vector<16x1xf32>
    %260 = vector.broadcast %259 : vector<16x1xf32> to vector<16x16xf32>
    %261 = arith.mulf %256, %260 : vector<16x16xf32>
    %262 = arith.truncf %261 : vector<16x16xf32> to vector<16x16xbf16>
    %cst_78 = arith.constant dense<0.000000e+00> : vector<16x8xf32>
    %263 = tpu.matmul %262, %249, %cst_78 {dimension_numbers = #tpu.dot_dimension_numbers<[1], [0], [0], [1], [0, 0, 1, 1], [], []>} : vector<16x16xbf16>, vector<16x8xbf16>, vector<16x8xf32> -> vector<16x8xf32>
    %264 = vector.extract_strided_slice %223 {offsets = [0, 16], sizes = [16, 8], strides = [1, 1]} : vector<16x96xf32> to vector<16x8xf32>
    %265 = arith.truncf %264 : vector<16x8xf32> to vector<16x8xbf16>
    %266 = vector.extract_strided_slice %223 {offsets = [0, 48], sizes = [16, 8], strides = [1, 1]} : vector<16x96xf32> to vector<16x8xf32>
    %267 = arith.truncf %266 : vector<16x8xf32> to vector<16x8xbf16>
    %268 = vector.extract_strided_slice %223 {offsets = [0, 80], sizes = [16, 8], strides = [1, 1]} : vector<16x96xf32> to vector<16x8xf32>
    %269 = arith.truncf %268 : vector<16x8xf32> to vector<16x8xbf16>
    %cst_79 = arith.constant dense<0.000000e+00> : vector<16x16xf32>
    %270 = tpu.matmul %265, %267, %cst_79 {dimension_numbers = #tpu.dot_dimension_numbers<[1], [1], [0], [0], [0, 0, 1, 0], [], []>} : vector<16x8xbf16>, vector<16x8xbf16>, vector<16x16xf32> -> vector<16x16xf32>
    %271 = arith.addf %270, %27 : vector<16x16xf32>
    %cst_80 = arith.constant dense<0xFF800000> : vector<16xf32>
    %272 = vector.multi_reduction <maximumf>, %271, %cst_80 [1] : vector<16x16xf32> to vector<16xf32>
    %273 = vector.shape_cast %272 : vector<16xf32> to vector<16x1xf32>
    %274 = vector.broadcast %273 : vector<16x1xf32> to vector<16x16xf32>
    %275 = arith.subf %271, %274 : vector<16x16xf32>
    %276 = math.exp %275 : vector<16x16xf32>
    %cst_81 = arith.constant dense<0.000000e+00> : vector<16xf32>
    %277 = vector.multi_reduction <add>, %276, %cst_81 [1] : vector<16x16xf32> to vector<16xf32>
    %278 = vector.shape_cast %277 : vector<16xf32> to vector<16x1xf32>
    %279 = tpu.reciprocal %278 {approx = true} : vector<16x1xf32> -> vector<16x1xf32>
    %280 = vector.broadcast %279 : vector<16x1xf32> to vector<16x16xf32>
    %281 = arith.mulf %276, %280 : vector<16x16xf32>
    %282 = arith.truncf %281 : vector<16x16xf32> to vector<16x16xbf16>
    %cst_82 = arith.constant dense<0.000000e+00> : vector<16x8xf32>
    %283 = tpu.matmul %282, %269, %cst_82 {dimension_numbers = #tpu.dot_dimension_numbers<[1], [0], [0], [1], [0, 0, 1, 1], [], []>} : vector<16x16xbf16>, vector<16x8xbf16>, vector<16x8xf32> -> vector<16x8xf32>
    %284 = vector.extract_strided_slice %223 {offsets = [0, 24], sizes = [16, 8], strides = [1, 1]} : vector<16x96xf32> to vector<16x8xf32>
    %285 = arith.truncf %284 : vector<16x8xf32> to vector<16x8xbf16>
    %286 = vector.extract_strided_slice %223 {offsets = [0, 56], sizes = [16, 8], strides = [1, 1]} : vector<16x96xf32> to vector<16x8xf32>
    %287 = arith.truncf %286 : vector<16x8xf32> to vector<16x8xbf16>
    %288 = vector.extract_strided_slice %223 {offsets = [0, 88], sizes = [16, 8], strides = [1, 1]} : vector<16x96xf32> to vector<16x8xf32>
    %289 = arith.truncf %288 : vector<16x8xf32> to vector<16x8xbf16>
    %cst_83 = arith.constant dense<0.000000e+00> : vector<16x16xf32>
    %290 = tpu.matmul %285, %287, %cst_83 {dimension_numbers = #tpu.dot_dimension_numbers<[1], [1], [0], [0], [0, 0, 1, 0], [], []>} : vector<16x8xbf16>, vector<16x8xbf16>, vector<16x16xf32> -> vector<16x16xf32>
    %291 = arith.addf %290, %27 : vector<16x16xf32>
    %cst_84 = arith.constant dense<0xFF800000> : vector<16xf32>
    %292 = vector.multi_reduction <maximumf>, %291, %cst_84 [1] : vector<16x16xf32> to vector<16xf32>
    %293 = vector.shape_cast %292 : vector<16xf32> to vector<16x1xf32>
    %294 = vector.broadcast %293 : vector<16x1xf32> to vector<16x16xf32>
    %295 = arith.subf %291, %294 : vector<16x16xf32>
    %296 = math.exp %295 : vector<16x16xf32>
    %cst_85 = arith.constant dense<0.000000e+00> : vector<16xf32>
    %297 = vector.multi_reduction <add>, %296, %cst_85 [1] : vector<16x16xf32> to vector<16xf32>
    %298 = vector.shape_cast %297 : vector<16xf32> to vector<16x1xf32>
    %299 = tpu.reciprocal %298 {approx = true} : vector<16x1xf32> -> vector<16x1xf32>
    %300 = vector.broadcast %299 : vector<16x1xf32> to vector<16x16xf32>
    %301 = arith.mulf %296, %300 : vector<16x16xf32>
    %302 = arith.truncf %301 : vector<16x16xf32> to vector<16x16xbf16>
    %cst_86 = arith.constant dense<0.000000e+00> : vector<16x8xf32>
    %303 = tpu.matmul %302, %289, %cst_86 {dimension_numbers = #tpu.dot_dimension_numbers<[1], [0], [0], [1], [0, 0, 1, 1], [], []>} : vector<16x16xbf16>, vector<16x8xbf16>, vector<16x8xf32> -> vector<16x8xf32>
    %304 = tpu.concatenate %243, %263, %283, %303 in 1 : vector<16x8xf32>, vector<16x8xf32>, vector<16x8xf32>, vector<16x8xf32> -> vector<16x32xf32>
    %305 = arith.truncf %304 : vector<16x32xf32> to vector<16x32xbf16>
    %cst_87 = arith.constant dense<0.000000e+00> : vector<16x32xf32>
    %306 = tpu.matmul %305, %209, %cst_87 {dimension_numbers = #tpu.dot_dimension_numbers<[1], [0], [0], [1], [0, 0, 1, 1], [], []>} : vector<16x32xbf16>, vector<32x32xbf16>, vector<16x32xf32> -> vector<16x32xf32>
    %307 = vector.broadcast %213 : vector<1x32xf32> to vector<16x32xf32>
    %308 = arith.addf %306, %307 : vector<16x32xf32>
    %309 = arith.addf %201, %308 : vector<16x32xf32>
    %cst_88 = arith.constant dense<0.000000e+00> : vector<16xf32>
    %310 = vector.multi_reduction <add>, %309, %cst_88 [1] : vector<16x32xf32> to vector<16xf32>
    %311 = vector.shape_cast %310 : vector<16xf32> to vector<16x1xf32>
    %cst_89 = arith.constant 3.200000e+01 : f32
    %312 = vector.broadcast %cst_89 : f32 to vector<16x1xf32>
    %313 = arith.divf %311, %312 : vector<16x1xf32>
    %314 = vector.broadcast %313 : vector<16x1xf32> to vector<16x32xf32>
    %315 = arith.subf %309, %314 : vector<16x32xf32>
    %316 = arith.mulf %315, %315 : vector<16x32xf32>
    %cst_90 = arith.constant dense<0.000000e+00> : vector<16xf32>
    %317 = vector.multi_reduction <add>, %316, %cst_90 [1] : vector<16x32xf32> to vector<16xf32>
    %318 = vector.shape_cast %317 : vector<16xf32> to vector<16x1xf32>
    %cst_91 = arith.constant 3.200000e+01 : f32
    %319 = vector.broadcast %cst_91 : f32 to vector<16x1xf32>
    %320 = arith.divf %318, %319 : vector<16x1xf32>
    %321 = vector.broadcast %313 : vector<16x1xf32> to vector<16x32xf32>
    %322 = arith.subf %309, %321 : vector<16x32xf32>
    %cst_92 = arith.constant 9.99999974E-6 : f32
    %323 = vector.broadcast %cst_92 : f32 to vector<16x1xf32>
    %324 = arith.addf %320, %323 : vector<16x1xf32>
    %325 = math.rsqrt %324 : vector<16x1xf32>
    %326 = vector.broadcast %325 : vector<16x1xf32> to vector<16x32xf32>
    %327 = arith.mulf %322, %326 : vector<16x32xf32>
    %328 = vector.broadcast %214 : vector<1x32xf32> to vector<16x32xf32>
    %329 = arith.mulf %327, %328 : vector<16x32xf32>
    %330 = vector.broadcast %215 : vector<1x32xf32> to vector<16x32xf32>
    %331 = arith.addf %329, %330 : vector<16x32xf32>
    %332 = arith.truncf %331 : vector<16x32xf32> to vector<16x32xbf16>
    %cst_93 = arith.constant dense<0.000000e+00> : vector<16x64xf32>
    %333 = tpu.matmul %332, %205, %cst_93 {dimension_numbers = #tpu.dot_dimension_numbers<[1], [0], [0], [1], [0, 0, 1, 1], [], []>} : vector<16x32xbf16>, vector<32x64xbf16>, vector<16x64xf32> -> vector<16x64xf32>
    %334 = vector.broadcast %216 : vector<1x64xf32> to vector<16x64xf32>
    %335 = arith.addf %333, %334 : vector<16x64xf32>
    %cst_94 = arith.constant 5.000000e-01 : f32
    %336 = vector.broadcast %cst_94 : f32 to vector<16x64xf32>
    %337 = arith.mulf %336, %335 : vector<16x64xf32>
    %338 = arith.mulf %335, %335 : vector<16x64xf32>
    %339 = arith.mulf %335, %338 : vector<16x64xf32>
    %cst_95 = arith.constant 4.471500e-02 : f32
    %340 = vector.broadcast %cst_95 : f32 to vector<16x64xf32>
    %341 = arith.mulf %340, %339 : vector<16x64xf32>
    %342 = arith.addf %335, %341 : vector<16x64xf32>
    %cst_96 = arith.constant 0.797884583 : f32
    %343 = vector.broadcast %cst_96 : f32 to vector<16x64xf32>
    %344 = arith.mulf %343, %342 : vector<16x64xf32>
    %345 = math.tanh %344 : vector<16x64xf32>
    %cst_97 = arith.constant 1.000000e+00 : f32
    %346 = vector.broadcast %cst_97 : f32 to vector<16x64xf32>
    %347 = arith.addf %346, %345 : vector<16x64xf32>
    %348 = arith.mulf %337, %347 : vector<16x64xf32>
    %349 = arith.truncf %348 : vector<16x64xf32> to vector<16x64xbf16>
    %cst_98 = arith.constant dense<0.000000e+00> : vector<16x32xf32>
    %350 = tpu.matmul %349, %207, %cst_98 {dimension_numbers = #tpu.dot_dimension_numbers<[1], [0], [0], [1], [0, 0, 1, 1], [], []>} : vector<16x64xbf16>, vector<64x32xbf16>, vector<16x32xf32> -> vector<16x32xf32>
    %351 = vector.broadcast %217 : vector<1x32xf32> to vector<16x32xf32>
    %352 = arith.addf %350, %351 : vector<16x32xf32>
    %353 = arith.addf %331, %352 : vector<16x32xf32>
    %cst_99 = arith.constant dense<0.000000e+00> : vector<16xf32>
    %354 = vector.multi_reduction <add>, %353, %cst_99 [1] : vector<16x32xf32> to vector<16xf32>
    %355 = vector.shape_cast %354 : vector<16xf32> to vector<16x1xf32>
    %cst_100 = arith.constant 3.200000e+01 : f32
    %356 = vector.broadcast %cst_100 : f32 to vector<16x1xf32>
    %357 = arith.divf %355, %356 : vector<16x1xf32>
    %358 = vector.broadcast %357 : vector<16x1xf32> to vector<16x32xf32>
    %359 = arith.subf %353, %358 : vector<16x32xf32>
    %360 = arith.mulf %359, %359 : vector<16x32xf32>
    %cst_101 = arith.constant dense<0.000000e+00> : vector<16xf32>
    %361 = vector.multi_reduction <add>, %360, %cst_101 [1] : vector<16x32xf32> to vector<16xf32>
    %362 = vector.shape_cast %361 : vector<16xf32> to vector<16x1xf32>
    %cst_102 = arith.constant 3.200000e+01 : f32
    %363 = vector.broadcast %cst_102 : f32 to vector<16x1xf32>
    %364 = arith.divf %362, %363 : vector<16x1xf32>
    %365 = vector.broadcast %357 : vector<16x1xf32> to vector<16x32xf32>
    %366 = arith.subf %353, %365 : vector<16x32xf32>
    %cst_103 = arith.constant 9.99999974E-6 : f32
    %367 = vector.broadcast %cst_103 : f32 to vector<16x1xf32>
    %368 = arith.addf %364, %367 : vector<16x1xf32>
    %369 = math.rsqrt %368 : vector<16x1xf32>
    %370 = vector.broadcast %369 : vector<16x1xf32> to vector<16x32xf32>
    %371 = arith.mulf %366, %370 : vector<16x32xf32>
    %372 = vector.broadcast %218 : vector<1x32xf32> to vector<16x32xf32>
    %373 = arith.mulf %371, %372 : vector<16x32xf32>
    %374 = vector.broadcast %219 : vector<1x32xf32> to vector<16x32xf32>
    %375 = arith.addf %373, %374 : vector<16x32xf32>
    %376 = vector.extract_strided_slice %375 {offsets = [0, 0], sizes = [1, 32], strides = [1, 1]} : vector<16x32xf32> to vector<1x32xf32>
    %377 = vector.extract_strided_slice %375 {offsets = [8, 0], sizes = [1, 32], strides = [1, 1]} : vector<16x32xf32> to vector<1x32xf32>
    %378 = tpu.concatenate %376, %377 in 0 : vector<1x32xf32>, vector<1x32xf32> -> vector<2x32xf32>
    %c144 = arith.constant 144 : index
    %c0_104 = arith.constant 0 : index
    %379 = vector.load %arg2[%c144, %c0_104] : memref<179x128xf32, #tpu.memory_space<vmem>>, vector<1x32xf32>
    %c145 = arith.constant 145 : index
    %c0_105 = arith.constant 0 : index
    %380 = vector.load %arg2[%c145, %c0_105] : memref<179x128xf32, #tpu.memory_space<vmem>>, vector<1x32xf32>
    %c146 = arith.constant 146 : index
    %c0_106 = arith.constant 0 : index
    %381 = vector.load %arg2[%c146, %c0_106] : memref<179x128xf32, #tpu.memory_space<vmem>>, vector<32x3xf32>
    %c178 = arith.constant 178 : index
    %c0_107 = arith.constant 0 : index
    %382 = vector.load %arg2[%c178, %c0_107] : memref<179x128xf32, #tpu.memory_space<vmem>>, vector<1x3xf32>
    %cst_108 = arith.constant dense<0.000000e+00> : vector<2xf32>
    %383 = vector.multi_reduction <add>, %378, %cst_108 [1] : vector<2x32xf32> to vector<2xf32>
    %384 = vector.shape_cast %383 : vector<2xf32> to vector<2x1xf32>
    %cst_109 = arith.constant 3.200000e+01 : f32
    %385 = vector.broadcast %cst_109 : f32 to vector<2x1xf32>
    %386 = arith.divf %384, %385 : vector<2x1xf32>
    %387 = vector.broadcast %386 : vector<2x1xf32> to vector<2x32xf32>
    %388 = arith.subf %378, %387 : vector<2x32xf32>
    %389 = arith.mulf %388, %388 : vector<2x32xf32>
    %cst_110 = arith.constant dense<0.000000e+00> : vector<2xf32>
    %390 = vector.multi_reduction <add>, %389, %cst_110 [1] : vector<2x32xf32> to vector<2xf32>
    %391 = vector.shape_cast %390 : vector<2xf32> to vector<2x1xf32>
    %cst_111 = arith.constant 3.200000e+01 : f32
    %392 = vector.broadcast %cst_111 : f32 to vector<2x1xf32>
    %393 = arith.divf %391, %392 : vector<2x1xf32>
    %394 = vector.broadcast %386 : vector<2x1xf32> to vector<2x32xf32>
    %395 = arith.subf %378, %394 : vector<2x32xf32>
    %cst_112 = arith.constant 9.99999974E-6 : f32
    %396 = vector.broadcast %cst_112 : f32 to vector<2x1xf32>
    %397 = arith.addf %393, %396 : vector<2x1xf32>
    %398 = math.rsqrt %397 : vector<2x1xf32>
    %399 = vector.broadcast %398 : vector<2x1xf32> to vector<2x32xf32>
    %400 = arith.mulf %395, %399 : vector<2x32xf32>
    %401 = vector.broadcast %379 : vector<1x32xf32> to vector<2x32xf32>
    %402 = arith.mulf %400, %401 : vector<2x32xf32>
    %403 = vector.broadcast %380 : vector<1x32xf32> to vector<2x32xf32>
    %404 = arith.addf %402, %403 : vector<2x32xf32>
    %405 = arith.truncf %404 : vector<2x32xf32> to vector<2x32xbf16>
    %406 = arith.truncf %381 : vector<32x3xf32> to vector<32x3xbf16>
    %cst_113 = arith.constant dense<0.000000e+00> : vector<2x3xf32>
    %407 = tpu.matmul %405, %406, %cst_113 {dimension_numbers = #tpu.dot_dimension_numbers<[1], [0], [0], [1], [0, 0, 1, 1], [], []>} : vector<2x32xbf16>, vector<32x3xbf16>, vector<2x3xf32> -> vector<2x3xf32>
    %408 = vector.broadcast %382 : vector<1x3xf32> to vector<2x3xf32>
    %409 = arith.addf %407, %408 : vector<2x3xf32>
    %c0_114 = arith.constant 0 : index
    %c0_115 = arith.constant 0 : index
    %410 = vector.load %arg5[%c0_114, %c0_115] : memref<2x3xf32, #tpu.memory_space<vmem>>, vector<2x3xf32>
    tpu.vector_store %arg5[%c0_114, %c0_115], %409 {strides = array<i32>} : memref<2x3xf32, #tpu.memory_space<vmem>>, vector<2x3xf32>,
    return
  }
}

</mosaic_0001>

<llo_original>
// kernel: _forward_impl.1
$region0: #{_forward_impl.1}
  #allocation0 [shape = 'u32[]', space=smem, size = 0x4, offset = 0x4, fixed_abs, tag = 'smem constant byte address 0x4 - core index']
  #allocation1 [shape = 'u32[144,128]{1,0:T(1,128)}', space=vmem, size = 0x12000, scoped, tag = 'internal scratch']
  %s0 = inlined_call_operand.vmem [shape: s32[16,1], index: 0, kind: input, shape index: {}]
  %s1 = inlined_call_operand.vmem [shape: s32[1,16], index: 1, kind: input, shape index: {}]
  %s2 = inlined_call_operand.hbm [shape: f32[179,128], index: 2, kind: input, shape index: {}]
  %s3 = inlined_call_operand.hbm [shape: bf16[2,160,128], index: 3, kind: input, shape index: {}]
  %s4 = inlined_call_operand.vmem [shape: f32[2,8,128], index: 4, kind: input, shape index: {}]
  %s5 = inlined_call_operand.hbm [shape: f32[2,3], index: 5, kind: output, shape index: {}]
  %s6 = sld [smem:[#allocation0]]
  $region38: #{_forward_impl.1} parent=0
    _
  %s8 = ssub.s32 1, %s6
  %s9 = scalar_select 0, %s8, %s6
  $region1: #{_forward_impl.1} parent=0
    #allocation2 [shape = 'u8[94208]{0}', space=vmem, size = 0x17000, scoped, tag = 'input window, operand 2, single buffered']
    #allocation3 [shape = 's32[1]{0}', space=sflag, size = 0x4, scoped, tag = 'scoped memory for _forward_impl.1']
    #allocation4 [shape = 's32[1]{0}', space=sflag, size = 0x4, scoped, tag = 'scoped memory for _forward_impl.1']
    #allocation5 [shape = 'u8[81920]{0}', space=vmem, size = 0x14000, scoped, tag = 'input window, operand 3, single buffered']
    #allocation6 [shape = 's32[1]{0}', space=sflag, size = 0x4, scoped, tag = 'scoped memory for _forward_impl.1']
    #allocation7 [shape = 'u8[1024]{0}', space=vmem, size = 0x400, scoped, tag = 'output window, operand 0, single buffered']
    %10 = vsyncpa [#allocation3], 0
    %11 = vsyncpa [#allocation6], 0
    %12 = vsyncpa [#allocation4], 0
    // Predicated region
    $region2: #{_forward_impl.1} parent=1 // pred_check
      _
    $region3: #{_forward_impl.1} parent=1 // pred_check_branch
      %14 = sbr.rel (0) target = $region5
    $region4: #{_forward_impl.1} parent=1 // pred_region
      _
    $region5: #{_forward_impl.1} parent=1 // pred_fallthru
      _
    // Predicated region
    $region6: #{_forward_impl.1} parent=1 // pred_check
      _
    $region7: #{_forward_impl.1} parent=1 // pred_check_branch
      %16 = sbr.rel (0) target = $region9
    $region8: #{_forward_impl.1} parent=1 // pred_region
      _
    $region9: #{_forward_impl.1} parent=1 // pred_fallthru
      _
    // Predicated region
    $region10: #{_forward_impl.1} parent=1 // pred_check
      _
    $region11: #{_forward_impl.1} parent=1 // pred_check_branch
      %18 = sbr.rel (0) target = $region13
    $region12: #{_forward_impl.1} parent=1 // pred_region
      %s20 = ssub.s32 2944, 2944
      %21 = vsyncadd [#allocation3], %s20
      %s22 = sshll.u32 [#allocation2], 4
      %s23 = int_to_ptr.vmem [resolvable:$true] %s22
      %28 = dma.hbm_to_vmem [thread:$0]  %s2, 2944, %s23, [#allocation3], 128, 128, 8
    $region13: #{_forward_impl.1} parent=1 // pred_fallthru
      _
    // Predicated region
    $region14: #{_forward_impl.1} parent=1 // pred_check
      _
    $region15: #{_forward_impl.1} parent=1 // pred_check_branch
      %30 = sbr.rel (0) target = $region17
    $region16: #{_forward_impl.1} parent=1 // pred_region
      %s32 = ssub.s32 2560, 2560
      %33 = vsyncadd [#allocation6], %s32
      %s34 = sshll.u32 [#allocation5], 4
      %s35 = int_to_ptr.vmem [resolvable:$true] %s34
      %40 = dma.hbm_to_vmem [thread:$0]  %s3, 2560, %s35, [#allocation6], 64, 64, 4
    $region17: #{_forward_impl.1} parent=1 // pred_fallthru
      _
    // Predicated region
    $region18: #{_forward_impl.1} parent=1 // pred_check
      _
    $region19: #{_forward_impl.1} parent=1 // pred_check_branch
      %42 = sbr.rel (0) target = $region21
    $region20: #{_forward_impl.1} parent=1 // pred_region
      _
    $region21: #{_forward_impl.1} parent=1 // pred_fallthru
      _
    // Predicated region
    $region22: #{_forward_impl.1} parent=1 // pred_check
      _
    $region23: #{_forward_impl.1} parent=1 // pred_check_branch
      %44 = sbr.rel (0) target = $region25
    $region24: #{_forward_impl.1} parent=1 // pred_region
      %45 = dma.done [#allocation3], 2944
    $region25: #{_forward_impl.1} parent=1 // pred_fallthru
      _
    // Predicated region
    $region26: #{_forward_impl.1} parent=1 // pred_check
      _
    $region27: #{_forward_impl.1} parent=1 // pred_check_branch
      %47 = sbr.rel (0) target = $region29
    $region28: #{_forward_impl.1} parent=1 // pred_region
      %48 = dma.done [#allocation6], 2560
    $region29: #{_forward_impl.1} parent=1 // pred_fallthru
      _
    %v50 = vld [vmem:[%s0] sm:$0xff]
    %v51 = vld [vmem:[%s0 + $0x8] sm:$0xff]
    %v52 = vlaneseq
    %v53 = vand.u32 %v52, 127
    %54 = vset.pattern.permute.xlu0 0
    %55 = vperm.xlu0 %54, %v50
    %v56 = vpop.permute.xlu0 %55
    %57 = vset.pattern.permute.xlu0 0
    %58 = vperm.xlu0 %57, %v51
    %v59 = vpop.permute.xlu0 %58
    %vm60 = vcmp.eq.s32.totalorder %v56, %v53
    %vm61 = vcmp.eq.s32.totalorder %v59, %v53
    %v62 = vsel %vm60, 1, 0
    %v63 = vsel %vm61, 1, 0
    %v64 = vcvt.s32.f32 %v62
    %v65 = vcvt.s32.f32 %v63
    %v66 = vpack.c.bf16 %v65, %v64
    %v67 = vld [vmem:[#allocation2] sm:$0xff]
    %v68 = vld [vmem:[#allocation2 + $0x8] sm:$0xff]
    %v69 = vld [vmem:[#allocation2 + $0x10] sm:$0xff]
    %v70 = vld [vmem:[#allocation2 + $0x18] sm:$0xff]
    %v71 = vld [vmem:[#allocation2 + $0x20] sm:$0xff]
    %v72 = vld [vmem:[#allocation2 + $0x28] sm:$0xff]
    %v73 = vld [vmem:[#allocation2 + $0x30] sm:$0xff]
    %v74 = vld [vmem:[#allocation2 + $0x38] sm:$0xff]
    %v75 = vld [vmem:[#allocation2 + $0x40] sm:$0xff]
    %v76 = vld [vmem:[#allocation2 + $0x48] sm:$0xff]
    %v77 = vld [vmem:[#allocation2 + $0x50] sm:$0xff]
    %v78 = vld [vmem:[#allocation2 + $0x58] sm:$0xff]
    %v79 = vld [vmem:[#allocation2 + $0x60] sm:$0xff]
    %v80 = vld [vmem:[#allocation2 + $0x68] sm:$0xff]
    %v81 = vld [vmem:[#allocation2 + $0x70] sm:$0xff]
    %v82 = vld [vmem:[#allocation2 + $0x78] sm:$0xff]
    %v83 = vpack.c.bf16 %v68, %v67
    %v84 = vpack.c.bf16 %v70, %v69
    %v85 = vpack.c.bf16 %v72, %v71
    %v86 = vpack.c.bf16 %v74, %v73
    %v87 = vpack.c.bf16 %v76, %v75
    %v88 = vpack.c.bf16 %v78, %v77
    %v89 = vpack.c.bf16 %v80, %v79
    %v90 = vpack.c.bf16 %v82, %v81
    %v91 = vld [vmem:[#allocation2 + $0x80] sm:$0xff]
    %92 = vmatprep.subr.bf16.mxu0 0
    %93 = vmatpush1.bf16.msra.mxu0 %v83
    %94 = vmatprep.subr.bf16.mxu0 0
    %95 = vmatpush1.bf16.msra.mxu0 %v84
    %96 = vmatprep.subr.bf16.mxu0 0
    %97 = vmatpush1.bf16.msra.mxu0 %v85
    %98 = vmatprep.subr.bf16.mxu0 0
    %99 = vmatpush1.bf16.msra.mxu0 %v86
    %100 = vmatprep.subr.bf16.mxu0 0
    %101 = vmatpush1.bf16.msra.mxu0 %v87
    %102 = vmatprep.subr.bf16.mxu0 0
    %103 = vmatpush1.bf16.msra.mxu0 %v88
    %104 = vmatprep.subr.bf16.mxu0 0
    %105 = vmatpush1.bf16.msra.mxu0 %v89
    %106 = vmatprep.subr.bf16.mxu0 0
    %107 = vmatpush1.bf16.msra.mxu0 %v90
    %108 = vmatprep.subr.bf16.mxu0 0
    %109 = vmatpush1.bf16.msra.mxu0 0
    %110 = vmatprep.subr.bf16.mxu0 0
    %111 = vmatpush1.bf16.msra.mxu0 0
    %112 = vmatprep.subr.bf16.mxu0 0
    %113 = vmatpush1.bf16.msra.mxu0 0
    %114 = vmatprep.subr.bf16.mxu0 0
    %115 = vmatpush1.bf16.msra.mxu0 0
    %116 = vmatprep.subr.bf16.mxu0 0
    %117 = vmatpush1.bf16.msra.mxu0 0
    %118 = vmatprep.subr.bf16.mxu0 0
    %119 = vmatpush1.bf16.msra.mxu0 0
    %120 = vmatprep.subr.bf16.mxu0 0
    %121 = vmatpush1.bf16.msra.mxu0 0
    %122 = vmatprep.subr.bf16.mxu0 0
    %123 = vmatpush1.bf16.msra.mxu0 0
    %124 = vmatprep.mubr.bf16.mxu0 0
    %125 = vmatmul.mubr.bf16.gmra.mrb[0].mxu0 %v66
    %v126 = vpop.f32.mrb[0].mxu0
    %v127 = vadd.f32 %v91, %v126
    %v128 = vpop.f32.mrb[0].mxu0
    %v129 = vpop.f32.mrb[0].mxu0
    %v130 = vadd.f32 %v91, %v129
    %v131 = vpop.f32.mrb[0].mxu0
    %132 = vdwg.mxu0
    %v133 = vld [vmem:[%s1] sm:$0x1]
    %v134 = vlaneseq
    %v135 = vshrl.u32 %v134, 7
    %v136 = vadd.s32 %v135, 8
    %v137 = vshra.s32 %v135, 3
    %v138 = vshra.s32 %v136, 3
    %v139 = vshra.s32 %v53, 3
    %vm140 = vcmp.eq.s32.totalorder %v137, %v139
    %vm141 = vcmp.eq.s32.totalorder %v138, %v139
    %vm142 = vcmp.ne.s32.totalorder %v133, 0
    %v143 = vsel %vm142, 1, 0
    %v144 = vlaneseq
    %v145 = vshrl.u32 %v144, 7
    %v146 = vsub.s32 0, %v145
    %v147 = vrot.slane %v143, %v146
    %vm148 = vcmp.eq.s32.totalorder %v147, 1
    %vm149 = vmand %vm140, %vm148
    %vm150 = vmand %vm141, %vm148
    %v151 = vsel %vm149, 0.0, -1e+09
    %v152 = vsel %vm150, 0.0, -1e+09
    %v153 = vld [vmem:[#allocation5] sm:$0xf]
    %v154 = vld [vmem:[#allocation5 + $0x4] sm:$0xf]
    %v155 = vld [vmem:[#allocation5 + $0x8] sm:$0xf]
    %v156 = vld [vmem:[#allocation5 + $0xc] sm:$0xf]
    %v157 = vld [vmem:[#allocation5 + $0x10] sm:$0xf]
    %v158 = vld [vmem:[#allocation5 + $0x14] sm:$0xf]
    %v159 = vld [vmem:[#allocation5 + $0x18] sm:$0xf]
    %v160 = vld [vmem:[#allocation5 + $0x1c] sm:$0xf]
    %v161 = vld [vmem:[#allocation5 + $0x20] sm:$0xf]
    %v162 = vld [vmem:[#allocation5 + $0x24] sm:$0xf]
    %v163 = vld [vmem:[#allocation5 + $0x28] sm:$0xf]
    %v164 = vld [vmem:[#allocation5 + $0x2c] sm:$0xf]
    %v165 = vld [vmem:[#allocation5 + $0x30] sm:$0xf]
    %v166 = vld [vmem:[#allocation5 + $0x34] sm:$0xf]
    %v167 = vld [vmem:[#allocation5 + $0x38] sm:$0xf]
    %v168 = vld [vmem:[#allocation5 + $0x3c] sm:$0xf]
    %v169 = vld [vmem:[#allocation5 + $0x40] sm:$0xf]
    %v170 = vld [vmem:[#allocation5 + $0x44] sm:$0xf]
    %v171 = vld [vmem:[#allocation5 + $0x48] sm:$0xf]
    %v172 = vld [vmem:[#allocation5 + $0x4c] sm:$0xf]
    %v173 = vld [vmem:[%s4] sm:$0xff]
    %v174 = vpack.c.bf16 %v130, %v127
    %v175 = vlaneseq
    %v176 = vshrl.u32 %v175, 7
    %v177 = vsub.s32 0, %v176
    %v178 = vrot.slane %v173, %v177
    %v183 = vunpack.c.l.b16 %v153
    %v184 = vunpack.c.l.b16 %v154
    %v185 = vunpack.c.l.b16 %v155
    %v186 = vunpack.c.l.b16 %v156
    %v187 = vpack.c.b16 %v184, %v183
    %v188 = vpack.c.b16 %v186, %v185
    %vm191 = vcmask 261120
    %v193 = vsel %vm191, %v174, 0
    %195 = vmatprep.subr.bf16.mxu0 0
    %196 = vmatpush1.bf16.msra.mxu0 %v187
    %197 = vmatprep.subr.bf16.mxu0 0
    %198 = vmatpush1.bf16.msra.mxu0 %v188
    %199 = vmatprep.subr.bf16.mxu0 0
    %200 = vmatpush1.bf16.msra.mxu0 0
    %201 = vmatprep.subr.bf16.mxu0 0
    %202 = vmatpush1.bf16.msra.mxu0 0
    %203 = vmatprep.subr.bf16.mxu0 0
    %204 = vmatpush1.bf16.msra.mxu0 0
    %205 = vmatprep.subr.bf16.mxu0 0
    %206 = vmatpush1.bf16.msra.mxu0 0
    %207 = vmatprep.subr.bf16.mxu0 0
    %208 = vmatpush1.bf16.msra.mxu0 0
    %209 = vmatprep.subr.bf16.mxu0 0
    %210 = vmatpush1.bf16.msra.mxu0 0
    %211 = vmatprep.subr.bf16.mxu0 0
    %212 = vmatpush1.bf16.msra.mxu0 0
    %213 = vmatprep.subr.bf16.mxu0 0
    %214 = vmatpush1.bf16.msra.mxu0 0
    %215 = vmatprep.subr.bf16.mxu0 0
    %216 = vmatpush1.bf16.msra.mxu0 0
    %217 = vmatprep.subr.bf16.mxu0 0
    %218 = vmatpush1.bf16.msra.mxu0 0
    %219 = vmatprep.subr.bf16.mxu0 0
    %220 = vmatpush1.bf16.msra.mxu0 0
    %221 = vmatprep.subr.bf16.mxu0 0
    %222 = vmatpush1.bf16.msra.mxu0 0
    %223 = vmatprep.subr.bf16.mxu0 0
    %224 = vmatpush1.bf16.msra.mxu0 0
    %225 = vmatprep.subr.bf16.mxu0 0
    %226 = vmatpush1.bf16.msra.mxu0 0
    %227 = vmatprep.mubr.bf16.mxu0 0
    %228 = vmatmul.mubr.bf16.gmra.mrb[0].mxu0 %v193
    %v229 = vpop.f32.mrb[0].mxu0
    %v230 = vadd.f32 %v178, %v229
    %v231 = vpop.f32.mrb[0].mxu0
    %v232 = vpop.f32.mrb[0].mxu0
    %v233 = vadd.f32 %v178, %v232
    %v234 = vpop.f32.mrb[0].mxu0
    %235 = vdwg.mxu0
    %v236 = vpack.c.bf16 %v233, %v230
    %238 = vrot.lane.b32.xlu0 %v236, 96
    %v239 = vpop.permute.xlu0 %238
    %vm240 = vcmask 64512
    %v242 = vsel %vm240, %v236, 0
    %v245 = vsel %vm240, %v239, 0
    %247 = vmatprep.subr.bf16.mxu0 0
    %248 = vmatpush1.bf16.xpose.msra.mxu0 %v245
    %249 = vmatprep.subr.bf16.mxu0 0
    %250 = vmatpush1.bf16.xpose.msra.mxu0 0
    %251 = vmatprep.subr.bf16.mxu0 0
    %252 = vmatpush1.bf16.xpose.msra.mxu0 0
    %253 = vmatprep.subr.bf16.mxu0 0
    %254 = vmatpush1.bf16.xpose.msra.mxu0 0
    %255 = vmatprep.subr.bf16.mxu0 0
    %256 = vmatpush1.bf16.xpose.msra.mxu0 0
    %257 = vmatprep.subr.bf16.mxu0 0
    %258 = vmatpush1.bf16.xpose.msra.mxu0 0
    %259 = vmatprep.subr.bf16.mxu0 0
    %260 = vmatpush1.bf16.xpose.msra.mxu0 0
    %261 = vmatprep.subr.bf16.mxu0 0
    %262 = vmatpush1.bf16.xpose.msra.mxu0 0
    %263 = vmatprep.subr.bf16.mxu0 0
    %264 = vmatpush1.bf16.xpose.msra.mxu0 0
    %265 = vmatprep.subr.bf16.mxu0 0
    %266 = vmatpush1.bf16.xpose.msra.mxu0 0
    %267 = vmatprep.subr.bf16.mxu0 0
    %268 = vmatpush1.bf16.xpose.msra.mxu0 0
    %269 = vmatprep.subr.bf16.mxu0 0
    %270 = vmatpush1.bf16.xpose.msra.mxu0 0
    %271 = vmatprep.subr.bf16.mxu0 0
    %272 = vmatpush1.bf16.xpose.msra.mxu0 0
    %273 = vmatprep.subr.bf16.mxu0 0
    %274 = vmatpush1.bf16.xpose.msra.mxu0 0
    %275 = vmatprep.subr.bf16.mxu0 0
    %276 = vmatpush1.bf16.xpose.msra.mxu0 0
    %277 = vmatprep.subr.bf16.mxu0 0
    %278 = vmatpush1.bf16.xpose.msra.mxu0 0
    %279 = vmatprep.mubr.bf16.mxu0 0
    %280 = vmatmul.mubr.bf16.gmra.mrb[0].mxu0 %v242
    %v281 = vpop.f32.mrb[0].mxu0
    %v282 = vadd.f32 %v151, %v281
    %v283 = vpop.f32.mrb[0].mxu0
    %v284 = vpop.f32.mrb[0].mxu0
    %v285 = vadd.f32 %v152, %v284
    %v286 = vpop.f32.mrb[0].mxu0
    %287 = vdwg.mxu0
    %vm288 = vcmask 130048
    %v289 = vsel %vm288, %v282, -inf
    %290 = vmax.xlane.f32.xlu0 %v289
    %v291 = vpop.xlane.xlu0 %290
    %v292 = vsel %vm288, %v285, -inf
    %293 = vmax.xlane.f32.xlu0 %v292
    %v294 = vpop.xlane.xlu0 %293
    %v295 = vsub.f32 %v282, %v291
    %v296 = vsub.f32 %v285, %v294
    %v297 = vmul.f32 %v295, 1.442695
    %v298 = vpow.pop %v297
    %v299 = vmul.f32 %v296, 1.442695
    %v300 = vpow.pop %v299
    %v301 = vsel %vm288, %v298, 0.0
    %302 = vadd.xlane.f32.xlu0 %v301
    %v303 = vpop.xlane.xlu0 %302
    %v304 = vsel %vm288, %v300, 0.0
    %305 = vadd.xlane.f32.xlu0 %v304
    %v306 = vpop.xlane.xlu0 %305
    %v307 = vrcp.pop %v303
    %v308 = vrcp.pop %v306
    %v309 = vmul.f32 %v298, %v307
    %v310 = vmul.f32 %v300, %v308
    %v311 = vpack.c.bf16 %v310, %v309
    %312 = vrot.lane.b32.xlu0 %v236, 64
    %v313 = vpop.permute.xlu0 %312
    %v316 = vsel %vm288, %v311, 0
    %318 = vmatprep.subr.bf16.mxu0 0
    %319 = vmatpush1.bf16.msra.mxu0 %v313
    %320 = vmatprep.subr.bf16.mxu0 0
    %321 = vmatpush1.bf16.msra.mxu0 0
    %322 = vmatprep.subr.bf16.mxu0 0
    %323 = vmatpush1.bf16.msra.mxu0 0
    %324 = vmatprep.subr.bf16.mxu0 0
    %325 = vmatpush1.bf16.msra.mxu0 0
    %326 = vmatprep.subr.bf16.mxu0 0
    %327 = vmatpush1.bf16.msra.mxu0 0
    %328 = vmatprep.subr.bf16.mxu0 0
    %329 = vmatpush1.bf16.msra.mxu0 0
    %330 = vmatprep.subr.bf16.mxu0 0
    %331 = vmatpush1.bf16.msra.mxu0 0
    %332 = vmatprep.subr.bf16.mxu0 0
    %333 = vmatpush1.bf16.msra.mxu0 0
    %334 = vmatprep.subr.bf16.mxu0 0
    %335 = vmatpush1.bf16.msra.mxu0 0
    %336 = vmatprep.subr.bf16.mxu0 0
    %337 = vmatpush1.bf16.msra.mxu0 0
    %338 = vmatprep.subr.bf16.mxu0 0
    %339 = vmatpush1.bf16.msra.mxu0 0
    %340 = vmatprep.subr.bf16.mxu0 0
    %341 = vmatpush1.bf16.msra.mxu0 0
    %342 = vmatprep.subr.bf16.mxu0 0
    %343 = vmatpush1.bf16.msra.mxu0 0
    %344 = vmatprep.subr.bf16.mxu0 0
    %345 = vmatpush1.bf16.msra.mxu0 0
    %346 = vmatprep.subr.bf16.mxu0 0
    %347 = vmatpush1.bf16.msra.mxu0 0
    %348 = vmatprep.subr.bf16.mxu0 0
    %349 = vmatpush1.bf16.msra.mxu0 0
    %350 = vmatprep.mubr.bf16.mxu0 0
    %351 = vmatmul.mubr.bf16.gmra.mrb[0].mxu0 %v316
    %v352 = vpop.f32.mrb[0].mxu0
    %v353 = vadd.f32 0.0, %v352
    %v354 = vpop.f32.mrb[0].mxu0
    %v355 = vpop.f32.mrb[0].mxu0
    %v356 = vadd.f32 0.0, %v355
    %v357 = vpop.f32.mrb[0].mxu0
    %358 = vdwg.mxu0
    %359 = vrot.lane.b32.xlu0 %v236, 120
    %v360 = vpop.permute.xlu0 %359
    %361 = vrot.lane.b32.xlu0 %v236, 88
    %v362 = vpop.permute.xlu0 %361
    %v364 = vsel %vm240, %v360, 0
    %v367 = vsel %vm240, %v362, 0
    %369 = vmatprep.subr.bf16.mxu0 0
    %370 = vmatpush1.bf16.xpose.msra.mxu0 %v367
    %371 = vmatprep.subr.bf16.mxu0 0
    %372 = vmatpush1.bf16.xpose.msra.mxu0 0
    %373 = vmatprep.subr.bf16.mxu0 0
    %374 = vmatpush1.bf16.xpose.msra.mxu0 0
    %375 = vmatprep.subr.bf16.mxu0 0
    %376 = vmatpush1.bf16.xpose.msra.mxu0 0
    %377 = vmatprep.subr.bf16.mxu0 0
    %378 = vmatpush1.bf16.xpose.msra.mxu0 0
    %379 = vmatprep.subr.bf16.mxu0 0
    %380 = vmatpush1.bf16.xpose.msra.mxu0 0
    %381 = vmatprep.subr.bf16.mxu0 0
    %382 = vmatpush1.bf16.xpose.msra.mxu0 0
    %383 = vmatprep.subr.bf16.mxu0 0
    %384 = vmatpush1.bf16.xpose.msra.mxu0 0
    %385 = vmatprep.subr.bf16.mxu0 0
    %386 = vmatpush1.bf16.xpose.msra.mxu0 0
    %387 = vmatprep.subr.bf16.mxu0 0
    %388 = vmatpush1.bf16.xpose.msra.mxu0 0
    %389 = vmatprep.subr.bf16.mxu0 0
    %390 = vmatpush1.bf16.xpose.msra.mxu0 0
    %391 = vmatprep.subr.bf16.mxu0 0
    %392 = vmatpush1.bf16.xpose.msra.mxu0 0
    %393 = vmatprep.subr.bf16.mxu0 0
    %394 = vmatpush1.bf16.xpose.msra.mxu0 0
    %395 = vmatprep.subr.bf16.mxu0 0
    %396 = vmatpush1.bf16.xpose.msra.mxu0 0
    %397 = vmatprep.subr.bf16.mxu0 0
    %398 = vmatpush1.bf16.xpose.msra.mxu0 0
    %399 = vmatprep.subr.bf16.mxu0 0
    %400 = vmatpush1.bf16.xpose.msra.mxu0 0
    %401 = vmatprep.mubr.bf16.mxu0 0
    %402 = vmatmul.mubr.bf16.gmra.mrb[0].mxu0 %v364
    %v403 = vpop.f32.mrb[0].mxu0
    %v404 = vadd.f32 %v151, %v403
    %v405 = vpop.f32.mrb[0].mxu0
    %v406 = vpop.f32.mrb[0].mxu0
    %v407 = vadd.f32 %v152, %v406
    %v408 = vpop.f32.mrb[0].mxu0
    %409 = vdwg.mxu0
    %v410 = vsel %vm288, %v404, -inf
    %411 = vmax.xlane.f32.xlu0 %v410
    %v412 = vpop.xlane.xlu0 %411
    %v413 = vsel %vm288, %v407, -inf
    %414 = vmax.xlane.f32.xlu0 %v413
    %v415 = vpop.xlane.xlu0 %414
    %v416 = vsub.f32 %v404, %v412
    %v417 = vsub.f32 %v407, %v415
    %v418 = vmul.f32 %v416, 1.442695
    %v419 = vpow.pop %v418
    %v420 = vmul.f32 %v417, 1.442695
    %v421 = vpow.pop %v420
    %v422 = vsel %vm288, %v419, 0.0
    %423 = vadd.xlane.f32.xlu0 %v422
    %v424 = vpop.xlane.xlu0 %423
    %v425 = vsel %vm288, %v421, 0.0
    %426 = vadd.xlane.f32.xlu0 %v425
    %v427 = vpop.xlane.xlu0 %426
    %v428 = vrcp.pop %v424
    %v429 = vrcp.pop %v427
    %v430 = vmul.f32 %v419, %v428
    %v431 = vmul.f32 %v421, %v429
    %v432 = vpack.c.bf16 %v431, %v430
    %433 = vrot.lane.b32.xlu0 %v236, 56
    %v434 = vpop.permute.xlu0 %433
    %v437 = vsel %vm288, %v432, 0
    %439 = vmatprep.subr.bf16.mxu0 0
    %440 = vmatpush1.bf16.msra.mxu0 %v434
    %441 = vmatprep.subr.bf16.mxu0 0
    %442 = vmatpush1.bf16.msra.mxu0 0
    %443 = vmatprep.subr.bf16.mxu0 0
    %444 = vmatpush1.bf16.msra.mxu0 0
    %445 = vmatprep.subr.bf16.mxu0 0
    %446 = vmatpush1.bf16.msra.mxu0 0
    %447 = vmatprep.subr.bf16.mxu0 0
    %448 = vmatpush1.bf16.msra.mxu0 0
    %449 = vmatprep.subr.bf16.mxu0 0
    %450 = vmatpush1.bf16.msra.mxu0 0
    %451 = vmatprep.subr.bf16.mxu0 0
    %452 = vmatpush1.bf16.msra.mxu0 0
    %453 = vmatprep.subr.bf16.mxu0 0
    %454 = vmatpush1.bf16.msra.mxu0 0
    %455 = vmatprep.subr.bf16.mxu0 0
    %456 = vmatpush1.bf16.msra.mxu0 0
    %457 = vmatprep.subr.bf16.mxu0 0
    %458 = vmatpush1.bf16.msra.mxu0 0
    %459 = vmatprep.subr.bf16.mxu0 0
    %460 = vmatpush1.bf16.msra.mxu0 0
    %461 = vmatprep.subr.bf16.mxu0 0
    %462 = vmatpush1.bf16.msra.mxu0 0
    %463 = vmatprep.subr.bf16.mxu0 0
    %464 = vmatpush1.bf16.msra.mxu0 0
    %465 = vmatprep.subr.bf16.mxu0 0
    %466 = vmatpush1.bf16.msra.mxu0 0
    %467 = vmatprep.subr.bf16.mxu0 0
    %468 = vmatpush1.bf16.msra.mxu0 0
    %469 = vmatprep.subr.bf16.mxu0 0
    %470 = vmatpush1.bf16.msra.mxu0 0
    %471 = vmatprep.mubr.bf16.mxu0 0
    %472 = vmatmul.mubr.bf16.gmra.mrb[0].mxu0 %v437
    %v473 = vpop.f32.mrb[0].mxu0
    %v474 = vadd.f32 0.0, %v473
    %v475 = vpop.f32.mrb[0].mxu0
    %v476 = vpop.f32.mrb[0].mxu0
    %v477 = vadd.f32 0.0, %v476
    %v478 = vpop.f32.mrb[0].mxu0
    %479 = vdwg.mxu0
    %480 = vrot.lane.b32.xlu0 %v236, 112
    %v481 = vpop.permute.xlu0 %480
    %482 = vrot.lane.b32.xlu0 %v236, 80
    %v483 = vpop.permute.xlu0 %482
    %v485 = vsel %vm240, %v481, 0
    %v488 = vsel %vm240, %v483, 0
    %490 = vmatprep.subr.bf16.mxu0 0
    %491 = vmatpush1.bf16.xpose.msra.mxu0 %v488
    %492 = vmatprep.subr.bf16.mxu0 0
    %493 = vmatpush1.bf16.xpose.msra.mxu0 0
    %494 = vmatprep.subr.bf16.mxu0 0
    %495 = vmatpush1.bf16.xpose.msra.mxu0 0
    %496 = vmatprep.subr.bf16.mxu0 0
    %497 = vmatpush1.bf16.xpose.msra.mxu0 0
    %498 = vmatprep.subr.bf16.mxu0 0
    %499 = vmatpush1.bf16.xpose.msra.mxu0 0
    %500 = vmatprep.subr.bf16.mxu0 0
    %501 = vmatpush1.bf16.xpose.msra.mxu0 0
    %502 = vmatprep.subr.bf16.mxu0 0
    %503 = vmatpush1.bf16.xpose.msra.mxu0 0
    %504 = vmatprep.subr.bf16.mxu0 0
    %505 = vmatpush1.bf16.xpose.msra.mxu0 0
    %506 = vmatprep.subr.bf16.mxu0 0
    %507 = vmatpush1.bf16.xpose.msra.mxu0 0
    %508 = vmatprep.subr.bf16.mxu0 0
    %509 = vmatpush1.bf16.xpose.msra.mxu0 0
    %510 = vmatprep.subr.bf16.mxu0 0
    %511 = vmatpush1.bf16.xpose.msra.mxu0 0
    %512 = vmatprep.subr.bf16.mxu0 0
    %513 = vmatpush1.bf16.xpose.msra.mxu0 0
    %514 = vmatprep.subr.bf16.mxu0 0
    %515 = vmatpush1.bf16.xpose.msra.mxu0 0
    %516 = vmatprep.subr.bf16.mxu0 0
    %517 = vmatpush1.bf16.xpose.msra.mxu0 0
    %518 = vmatprep.subr.bf16.mxu0 0
    %519 = vmatpush1.bf16.xpose.msra.mxu0 0
    %520 = vmatprep.subr.bf16.mxu0 0
    %521 = vmatpush1.bf16.xpose.msra.mxu0 0
    %522 = vmatprep.mubr.bf16.mxu0 0
    %523 = vmatmul.mubr.bf16.gmra.mrb[0].mxu0 %v485
    %v524 = vpop.f32.mrb[0].mxu0
    %v525 = vadd.f32 %v151, %v524
    %v526 = vpop.f32.mrb[0].mxu0
    %v527 = vpop.f32.mrb[0].mxu0
    %v528 = vadd.f32 %v152, %v527
    %v529 = vpop.f32.mrb[0].mxu0
    %530 = vdwg.mxu0
    %v531 = vsel %vm288, %v525, -inf
    %532 = vmax.xlane.f32.xlu0 %v531
    %v533 = vpop.xlane.xlu0 %532
    %v534 = vsel %vm288, %v528, -inf
    %535 = vmax.xlane.f32.xlu0 %v534
    %v536 = vpop.xlane.xlu0 %535
    %v537 = vsub.f32 %v525, %v533
    %v538 = vsub.f32 %v528, %v536
    %v539 = vmul.f32 %v537, 1.442695
    %v540 = vpow.pop %v539
    %v541 = vmul.f32 %v538, 1.442695
    %v542 = vpow.pop %v541
    %v543 = vsel %vm288, %v540, 0.0
    %544 = vadd.xlane.f32.xlu0 %v543
    %v545 = vpop.xlane.xlu0 %544
    %v546 = vsel %vm288, %v542, 0.0
    %547 = vadd.xlane.f32.xlu0 %v546
    %v548 = vpop.xlane.xlu0 %547
    %v549 = vrcp.pop %v545
    %v550 = vrcp.pop %v548
    %v551 = vmul.f32 %v540, %v549
    %v552 = vmul.f32 %v542, %v550
    %v553 = vpack.c.bf16 %v552, %v551
    %554 = vrot.lane.b32.xlu0 %v236, 48
    %v555 = vpop.permute.xlu0 %554
    %v558 = vsel %vm288, %v553, 0
    %560 = vmatprep.subr.bf16.mxu0 0
    %561 = vmatpush1.bf16.msra.mxu0 %v555
    %562 = vmatprep.subr.bf16.mxu0 0
    %563 = vmatpush1.bf16.msra.mxu0 0
    %564 = vmatprep.subr.bf16.mxu0 0
    %565 = vmatpush1.bf16.msra.mxu0 0
    %566 = vmatprep.subr.bf16.mxu0 0
    %567 = vmatpush1.bf16.msra.mxu0 0
    %568 = vmatprep.subr.bf16.mxu0 0
    %569 = vmatpush1.bf16.msra.mxu0 0
    %570 = vmatprep.subr.bf16.mxu0 0
    %571 = vmatpush1.bf16.msra.mxu0 0
    %572 = vmatprep.subr.bf16.mxu0 0
    %573 = vmatpush1.bf16.msra.mxu0 0
    %574 = vmatprep.subr.bf16.mxu0 0
    %575 = vmatpush1.bf16.msra.mxu0 0
    %576 = vmatprep.subr.bf16.mxu0 0
    %577 = vmatpush1.bf16.msra.mxu0 0
    %578 = vmatprep.subr.bf16.mxu0 0
    %579 = vmatpush1.bf16.msra.mxu0 0
    %580 = vmatprep.subr.bf16.mxu0 0
    %581 = vmatpush1.bf16.msra.mxu0 0
    %582 = vmatprep.subr.bf16.mxu0 0
    %583 = vmatpush1.bf16.msra.mxu0 0
    %584 = vmatprep.subr.bf16.mxu0 0
    %585 = vmatpush1.bf16.msra.mxu0 0
    %586 = vmatprep.subr.bf16.mxu0 0
    %587 = vmatpush1.bf16.msra.mxu0 0
    %588 = vmatprep.subr.bf16.mxu0 0
    %589 = vmatpush1.bf16.msra.mxu0 0
    %590 = vmatprep.subr.bf16.mxu0 0
    %591 = vmatpush1.bf16.msra.mxu0 0
    %592 = vmatprep.mubr.bf16.mxu0 0
    %593 = vmatmul.mubr.bf16.gmra.mrb[0].mxu0 %v558
    %v594 = vpop.f32.mrb[0].mxu0
    %v595 = vadd.f32 0.0, %v594
    %v596 = vpop.f32.mrb[0].mxu0
    %v597 = vpop.f32.mrb[0].mxu0
    %v598 = vadd.f32 0.0, %v597
    %v599 = vpop.f32.mrb[0].mxu0
    %600 = vdwg.mxu0
    %601 = vrot.lane.b32.xlu0 %v236, 104
    %v602 = vpop.permute.xlu0 %601
    %603 = vrot.lane.b32.xlu0 %v236, 72
    %v604 = vpop.permute.xlu0 %603
    %v606 = vsel %vm240, %v602, 0
    %v609 = vsel %vm240, %v604, 0
    %611 = vmatprep.subr.bf16.mxu0 0
    %612 = vmatpush1.bf16.xpose.msra.mxu0 %v609
    %613 = vmatprep.subr.bf16.mxu0 0
    %614 = vmatpush1.bf16.xpose.msra.mxu0 0
    %615 = vmatprep.subr.bf16.mxu0 0
    %616 = vmatpush1.bf16.xpose.msra.mxu0 0
    %617 = vmatprep.subr.bf16.mxu0 0
    %618 = vmatpush1.bf16.xpose.msra.mxu0 0
    %619 = vmatprep.subr.bf16.mxu0 0
    %620 = vmatpush1.bf16.xpose.msra.mxu0 0
    %621 = vmatprep.subr.bf16.mxu0 0
    %622 = vmatpush1.bf16.xpose.msra.mxu0 0
    %623 = vmatprep.subr.bf16.mxu0 0
    %624 = vmatpush1.bf16.xpose.msra.mxu0 0
    %625 = vmatprep.subr.bf16.mxu0 0
    %626 = vmatpush1.bf16.xpose.msra.mxu0 0
    %627 = vmatprep.subr.bf16.mxu0 0
    %628 = vmatpush1.bf16.xpose.msra.mxu0 0
    %629 = vmatprep.subr.bf16.mxu0 0
    %630 = vmatpush1.bf16.xpose.msra.mxu0 0
    %631 = vmatprep.subr.bf16.mxu0 0
    %632 = vmatpush1.bf16.xpose.msra.mxu0 0
    %633 = vmatprep.subr.bf16.mxu0 0
    %634 = vmatpush1.bf16.xpose.msra.mxu0 0
    %635 = vmatprep.subr.bf16.mxu0 0
    %636 = vmatpush1.bf16.xpose.msra.mxu0 0
    %637 = vmatprep.subr.bf16.mxu0 0
    %638 = vmatpush1.bf16.xpose.msra.mxu0 0
    %639 = vmatprep.subr.bf16.mxu0 0
    %640 = vmatpush1.bf16.xpose.msra.mxu0 0
    %641 = vmatprep.subr.bf16.mxu0 0
    %642 = vmatpush1.bf16.xpose.msra.mxu0 0
    %643 = vmatprep.mubr.bf16.mxu0 0
    %644 = vmatmul.mubr.bf16.gmra.mrb[0].mxu0 %v606
    %v645 = vpop.f32.mrb[0].mxu0
    %v646 = vadd.f32 %v151, %v645
    %v647 = vpop.f32.mrb[0].mxu0
    %v648 = vpop.f32.mrb[0].mxu0
    %v649 = vadd.f32 %v152, %v648
    %v650 = vpop.f32.mrb[0].mxu0
    %651 = vdwg.mxu0
    %v652 = vsel %vm288, %v646, -inf
    %653 = vmax.xlane.f32.xlu0 %v652
    %v654 = vpop.xlane.xlu0 %653
    %v655 = vsel %vm288, %v649, -inf
    %656 = vmax.xlane.f32.xlu0 %v655
    %v657 = vpop.xlane.xlu0 %656
    %v658 = vsub.f32 %v646, %v654
    %v659 = vsub.f32 %v649, %v657
    %v660 = vmul.f32 %v658, 1.442695
    %v661 = vpow.pop %v660
    %v662 = vmul.f32 %v659, 1.442695
    %v663 = vpow.pop %v662
    %v664 = vsel %vm288, %v661, 0.0
    %665 = vadd.xlane.f32.xlu0 %v664
    %v666 = vpop.xlane.xlu0 %665
    %v667 = vsel %vm288, %v663, 0.0
    %668 = vadd.xlane.f32.xlu0 %v667
    %v669 = vpop.xlane.xlu0 %668
    %v670 = vrcp.pop %v666
    %v671 = vrcp.pop %v669
    %v672 = vmul.f32 %v661, %v670
    %v673 = vmul.f32 %v663, %v671
    %v674 = vpack.c.bf16 %v673, %v672
    %675 = vrot.lane.b32.xlu0 %v236, 40
    %v676 = vpop.permute.xlu0 %675
    %v679 = vsel %vm288, %v674, 0
    %681 = vmatprep.subr.bf16.mxu0 0
    %682 = vmatpush1.bf16.msra.mxu0 %v676
    %683 = vmatprep.subr.bf16.mxu0 0
    %684 = vmatpush1.bf16.msra.mxu0 0
    %685 = vmatprep.subr.bf16.mxu0 0
    %686 = vmatpush1.bf16.msra.mxu0 0
    %687 = vmatprep.subr.bf16.mxu0 0
    %688 = vmatpush1.bf16.msra.mxu0 0
    %689 = vmatprep.subr.bf16.mxu0 0
    %690 = vmatpush1.bf16.msra.mxu0 0
    %691 = vmatprep.subr.bf16.mxu0 0
    %692 = vmatpush1.bf16.msra.mxu0 0
    %693 = vmatprep.subr.bf16.mxu0 0
    %694 = vmatpush1.bf16.msra.mxu0 0
    %695 = vmatprep.subr.bf16.mxu0 0
    %696 = vmatpush1.bf16.msra.mxu0 0
    %697 = vmatprep.subr.bf16.mxu0 0
    %698 = vmatpush1.bf16.msra.mxu0 0
    %699 = vmatprep.subr.bf16.mxu0 0
    %700 = vmatpush1.bf16.msra.mxu0 0
    %701 = vmatprep.subr.bf16.mxu0 0
    %702 = vmatpush1.bf16.msra.mxu0 0
    %703 = vmatprep.subr.bf16.mxu0 0
    %704 = vmatpush1.bf16.msra.mxu0 0
    %705 = vmatprep.subr.bf16.mxu0 0
    %706 = vmatpush1.bf16.msra.mxu0 0
    %707 = vmatprep.subr.bf16.mxu0 0
    %708 = vmatpush1.bf16.msra.mxu0 0
    %709 = vmatprep.subr.bf16.mxu0 0
    %710 = vmatpush1.bf16.msra.mxu0 0
    %711 = vmatprep.subr.bf16.mxu0 0
    %712 = vmatpush1.bf16.msra.mxu0 0
    %713 = vmatprep.mubr.bf16.mxu0 0
    %714 = vmatmul.mubr.bf16.gmra.mrb[0].mxu0 %v679
    %v715 = vpop.f32.mrb[0].mxu0
    %v716 = vadd.f32 0.0, %v715
    %v717 = vpop.f32.mrb[0].mxu0
    %v718 = vpop.f32.mrb[0].mxu0
    %v719 = vadd.f32 0.0, %v718
    %v720 = vpop.f32.mrb[0].mxu0
    %721 = vdwg.mxu0
    %724 = vrot.lane.b32.xlu0 %v474, 8
    %v725 = vpop.permute.xlu0 %724
    %726 = vrot.lane.b32.xlu0 %v477, 8
    %v727 = vpop.permute.xlu0 %726
    %732 = vrot.lane.b32.xlu0 %v595, 16
    %v733 = vpop.permute.xlu0 %732
    %734 = vrot.lane.b32.xlu0 %v598, 16
    %v735 = vpop.permute.xlu0 %734
    %740 = vrot.lane.b32.xlu0 %v716, 24
    %v741 = vpop.permute.xlu0 %740
    %742 = vrot.lane.b32.xlu0 %v719, 24
    %v743 = vpop.permute.xlu0 %742
    %v746 = vsel %vm240, %v353, %v725
    %v747 = vsel %vm240, %v356, %v727
    %v748 = vsel %vm288, %v746, %v733
    %v749 = vsel %vm288, %v747, %v735
    %vm750 = vcmask 195584
    %v751 = vsel %vm750, %v748, %v741
    %v752 = vsel %vm750, %v749, %v743
    %v753 = vpack.c.bf16 %v752, %v751
    %v754 = vlaneseq
    %v755 = vshrl.u32 %v754, 7
    %v756 = vsub.s32 1, %v755
    %v757 = vrot.slane %v173, %v756
    %v762 = vunpack.c.l.b16 %v169
    %v763 = vunpack.c.l.b16 %v170
    %v764 = vunpack.c.l.b16 %v171
    %v765 = vunpack.c.l.b16 %v172
    %v766 = vpack.c.b16 %v763, %v762
    %v767 = vpack.c.b16 %v765, %v764
    %v771 = vsel %vm191, %v753, 0
    %773 = vmatprep.subr.bf16.mxu0 0
    %774 = vmatpush1.bf16.msra.mxu0 %v766
    %775 = vmatprep.subr.bf16.mxu0 0
    %776 = vmatpush1.bf16.msra.mxu0 %v767
    %777 = vmatprep.subr.bf16.mxu0 0
    %778 = vmatpush1.bf16.msra.mxu0 0
    %779 = vmatprep.subr.bf16.mxu0 0
    %780 = vmatpush1.bf16.msra.mxu0 0
    %781 = vmatprep.subr.bf16.mxu0 0
    %782 = vmatpush1.bf16.msra.mxu0 0
    %783 = vmatprep.subr.bf16.mxu0 0
    %784 = vmatpush1.bf16.msra.mxu0 0
    %785 = vmatprep.subr.bf16.mxu0 0
    %786 = vmatpush1.bf16.msra.mxu0 0
    %787 = vmatprep.subr.bf16.mxu0 0
    %788 = vmatpush1.bf16.msra.mxu0 0
    %789 = vmatprep.subr.bf16.mxu0 0
    %790 = vmatpush1.bf16.msra.mxu0 0
    %791 = vmatprep.subr.bf16.mxu0 0
    %792 = vmatpush1.bf16.msra.mxu0 0
    %793 = vmatprep.subr.bf16.mxu0 0
    %794 = vmatpush1.bf16.msra.mxu0 0
    %795 = vmatprep.subr.bf16.mxu0 0
    %796 = vmatpush1.bf16.msra.mxu0 0
    %797 = vmatprep.subr.bf16.mxu0 0
    %798 = vmatpush1.bf16.msra.mxu0 0
    %799 = vmatprep.subr.bf16.mxu0 0
    %800 = vmatpush1.bf16.msra.mxu0 0
    %801 = vmatprep.subr.bf16.mxu0 0
    %802 = vmatpush1.bf16.msra.mxu0 0
    %803 = vmatprep.subr.bf16.mxu0 0
    %804 = vmatpush1.bf16.msra.mxu0 0
    %805 = vmatprep.mubr.bf16.mxu0 0
    %806 = vmatmul.mubr.bf16.gmra.mrb[0].mxu0 %v771
    %v807 = vpop.f32.mrb[0].mxu0
    %v808 = vadd.f32 %v757, %v807
    %v809 = vpop.f32.mrb[0].mxu0
    %v810 = vpop.f32.mrb[0].mxu0
    %v811 = vadd.f32 %v757, %v810
    %v812 = vpop.f32.mrb[0].mxu0
    %813 = vdwg.mxu0
    %v814 = vadd.f32 %v127, %v808
    %v815 = vadd.f32 %v130, %v811
    %v816 = vsel %vm191, %v814, 0.0
    %817 = vadd.xlane.f32.xlu0 %v816
    %v818 = vpop.xlane.xlu0 %817
    %v819 = vsel %vm191, %v815, 0.0
    %820 = vadd.xlane.f32.xlu0 %v819
    %v821 = vpop.xlane.xlu0 %820
    %v822 = vrcp.pop 32.0
    %v823 = vmul.f32 %v818, %v822
    %v824 = vmul.f32 %v821, %v822
    %v825 = vsub.f32 %v814, %v823
    %v826 = vsub.f32 %v815, %v824
    %v827 = vmul.f32 %v825, %v825
    %v828 = vmul.f32 %v826, %v826
    %v829 = vsel %vm191, %v827, 0.0
    %830 = vadd.xlane.f32.xlu0 %v829
    %v831 = vpop.xlane.xlu0 %830
    %v832 = vsel %vm191, %v828, 0.0
    %833 = vadd.xlane.f32.xlu0 %v832
    %v834 = vpop.xlane.xlu0 %833
    %v835 = vmul.f32 %v831, %v822
    %v836 = vmul.f32 %v834, %v822
    %v837 = vadd.f32 %v835, 1e-05
    %v838 = vadd.f32 %v836, 1e-05
    %v839 = vrsqrt.pop %v837
    %v840 = vrsqrt.pop %v838
    %v841 = vmul.f32 %v825, %v839
    %v842 = vmul.f32 %v826, %v840
    %v843 = vlaneseq
    %v844 = vshrl.u32 %v843, 7
    %v845 = vsub.s32 2, %v844
    %v846 = vrot.slane %v173, %v845
    %v847 = vmul.f32 %v841, %v846
    %v848 = vmul.f32 %v842, %v846
    %v849 = vlaneseq
    %v850 = vshrl.u32 %v849, 7
    %v851 = vsub.s32 3, %v850
    %v852 = vrot.slane %v173, %v851
    %v853 = vadd.f32 %v847, %v852
    %v854 = vadd.f32 %v848, %v852
    %v855 = vpack.c.bf16 %v854, %v853
    %v856 = vlaneseq
    %v857 = vshrl.u32 %v856, 7
    %v858 = vsub.s32 4, %v857
    %v859 = vrot.slane %v173, %v858
    %v864 = vunpack.c.l.b16 %v157
    %v865 = vunpack.c.l.b16 %v158
    %v866 = vunpack.c.l.b16 %v159
    %v867 = vunpack.c.l.b16 %v160
    %v868 = vpack.c.b16 %v865, %v864
    %v869 = vpack.c.b16 %v867, %v866
    %v873 = vsel %vm191, %v855, 0
    %875 = vmatprep.subr.bf16.mxu0 0
    %876 = vmatpush1.bf16.msra.mxu0 %v868
    %877 = vmatprep.subr.bf16.mxu0 0
    %878 = vmatpush1.bf16.msra.mxu0 %v869
    %879 = vmatprep.subr.bf16.mxu0 0
    %880 = vmatpush1.bf16.msra.mxu0 0
    %881 = vmatprep.subr.bf16.mxu0 0
    %882 = vmatpush1.bf16.msra.mxu0 0
    %883 = vmatprep.subr.bf16.mxu0 0
    %884 = vmatpush1.bf16.msra.mxu0 0
    %885 = vmatprep.subr.bf16.mxu0 0
    %886 = vmatpush1.bf16.msra.mxu0 0
    %887 = vmatprep.subr.bf16.mxu0 0
    %888 = vmatpush1.bf16.msra.mxu0 0
    %889 = vmatprep.subr.bf16.mxu0 0
    %890 = vmatpush1.bf16.msra.mxu0 0
    %891 = vmatprep.subr.bf16.mxu0 0
    %892 = vmatpush1.bf16.msra.mxu0 0
    %893 = vmatprep.subr.bf16.mxu0 0
    %894 = vmatpush1.bf16.msra.mxu0 0
    %895 = vmatprep.subr.bf16.mxu0 0
    %896 = vmatpush1.bf16.msra.mxu0 0
    %897 = vmatprep.subr.bf16.mxu0 0
    %898 = vmatpush1.bf16.msra.mxu0 0
    %899 = vmatprep.subr.bf16.mxu0 0
    %900 = vmatpush1.bf16.msra.mxu0 0
    %901 = vmatprep.subr.bf16.mxu0 0
    %902 = vmatpush1.bf16.msra.mxu0 0
    %903 = vmatprep.subr.bf16.mxu0 0
    %904 = vmatpush1.bf16.msra.mxu0 0
    %905 = vmatprep.subr.bf16.mxu0 0
    %906 = vmatpush1.bf16.msra.mxu0 0
    %907 = vmatprep.mubr.bf16.mxu0 0
    %908 = vmatmul.mubr.bf16.gmra.mrb[0].mxu0 %v873
    %v909 = vpop.f32.mrb[0].mxu0
    %v910 = vadd.f32 %v859, %v909
    %v911 = vpop.f32.mrb[0].mxu0
    %v912 = vpop.f32.mrb[0].mxu0
    %v913 = vadd.f32 %v859, %v912
    %v914 = vpop.f32.mrb[0].mxu0
    %915 = vdwg.mxu0
    %v916 = vmul.f32 %v910, 0.5
    %v917 = vmul.f32 %v913, 0.5
    %v918 = vmul.f32 %v910, %v910
    %v919 = vmul.f32 %v913, %v913
    %v920 = vmul.f32 %v910, %v918
    %v921 = vmul.f32 %v913, %v919
    %v922 = vmul.f32 %v920, 0.044715
    %v923 = vmul.f32 %v921, 0.044715
    %v924 = vadd.f32 %v910, %v922
    %v925 = vadd.f32 %v913, %v923
    %v926 = vmul.f32 %v924, 0.7978846
    %v927 = vmul.f32 %v925, 0.7978846
    %v928 = vtanh.pop %v926
    %v929 = vtanh.pop %v927
    %v930 = vadd.f32 %v928, 1.0
    %v931 = vadd.f32 %v929, 1.0
    %v932 = vmul.f32 %v916, %v930
    %v933 = vmul.f32 %v917, %v931
    %v934 = vpack.c.bf16 %v933, %v932
    %v935 = vlaneseq
    %v936 = vshrl.u32 %v935, 7
    %v937 = vsub.s32 5, %v936
    %v938 = vrot.slane %v173, %v937
    %v947 = vunpack.c.l.b16 %v161
    %v948 = vunpack.c.l.b16 %v162
    %v949 = vunpack.c.l.b16 %v163
    %v950 = vunpack.c.l.b16 %v164
    %v951 = vunpack.c.l.b16 %v165
    %v952 = vunpack.c.l.b16 %v166
    %v953 = vunpack.c.l.b16 %v167
    %v954 = vunpack.c.l.b16 %v168
    %v955 = vpack.c.b16 %v948, %v947
    %v956 = vpack.c.b16 %v950, %v949
    %v957 = vpack.c.b16 %v952, %v951
    %v958 = vpack.c.b16 %v954, %v953
    %vm963 = vcmask 523264
    %v965 = vsel %vm963, %v934, 0
    %967 = vmatprep.subr.bf16.mxu0 0
    %968 = vmatpush1.bf16.msra.mxu0 %v955
    %969 = vmatprep.subr.bf16.mxu0 0
    %970 = vmatpush1.bf16.msra.mxu0 %v956
    %971 = vmatprep.subr.bf16.mxu0 0
    %972 = vmatpush1.bf16.msra.mxu0 %v957
    %973 = vmatprep.subr.bf16.mxu0 0
    %974 = vmatpush1.bf16.msra.mxu0 %v958
    %975 = vmatprep.subr.bf16.mxu0 0
    %976 = vmatpush1.bf16.msra.mxu0 0
    %977 = vmatprep.subr.bf16.mxu0 0
    %978 = vmatpush1.bf16.msra.mxu0 0
    %979 = vmatprep.subr.bf16.mxu0 0
    %980 = vmatpush1.bf16.msra.mxu0 0
    %981 = vmatprep.subr.bf16.mxu0 0
    %982 = vmatpush1.bf16.msra.mxu0 0
    %983 = vmatprep.subr.bf16.mxu0 0
    %984 = vmatpush1.bf16.msra.mxu0 0
    %985 = vmatprep.subr.bf16.mxu0 0
    %986 = vmatpush1.bf16.msra.mxu0 0
    %987 = vmatprep.subr.bf16.mxu0 0
    %988 = vmatpush1.bf16.msra.mxu0 0
    %989 = vmatprep.subr.bf16.mxu0 0
    %990 = vmatpush1.bf16.msra.mxu0 0
    %991 = vmatprep.subr.bf16.mxu0 0
    %992 = vmatpush1.bf16.msra.mxu0 0
    %993 = vmatprep.subr.bf16.mxu0 0
    %994 = vmatpush1.bf16.msra.mxu0 0
    %995 = vmatprep.subr.bf16.mxu0 0
    %996 = vmatpush1.bf16.msra.mxu0 0
    %997 = vmatprep.subr.bf16.mxu0 0
    %998 = vmatpush1.bf16.msra.mxu0 0
    %999 = vmatprep.mubr.bf16.mxu0 0
    %1000 = vmatmul.mubr.bf16.gmra.mrb[0].mxu0 %v965
    %v1001 = vpop.f32.mrb[0].mxu0
    %v1002 = vadd.f32 %v938, %v1001
    %v1003 = vpop.f32.mrb[0].mxu0
    %v1004 = vpop.f32.mrb[0].mxu0
    %v1005 = vadd.f32 %v938, %v1004
    %v1006 = vpop.f32.mrb[0].mxu0
    %1007 = vdwg.mxu0
    %v1008 = vadd.f32 %v853, %v1002
    %v1009 = vadd.f32 %v854, %v1005
    %v1010 = vsel %vm191, %v1008, 0.0
    %1011 = vadd.xlane.f32.xlu0 %v1010
    %v1012 = vpop.xlane.xlu0 %1011
    %v1013 = vsel %vm191, %v1009, 0.0
    %1014 = vadd.xlane.f32.xlu0 %v1013
    %v1015 = vpop.xlane.xlu0 %1014
    %v1016 = vmul.f32 %v1012, %v822
    %v1017 = vmul.f32 %v1015, %v822
    %v1018 = vsub.f32 %v1008, %v1016
    %v1019 = vsub.f32 %v1009, %v1017
    %v1020 = vmul.f32 %v1018, %v1018
    %v1021 = vmul.f32 %v1019, %v1019
    %v1022 = vsel %vm191, %v1020, 0.0
    %1023 = vadd.xlane.f32.xlu0 %v1022
    %v1024 = vpop.xlane.xlu0 %1023
    %v1025 = vsel %vm191, %v1021, 0.0
    %1026 = vadd.xlane.f32.xlu0 %v1025
    %v1027 = vpop.xlane.xlu0 %1026
    %v1028 = vmul.f32 %v1024, %v822
    %v1029 = vmul.f32 %v1027, %v822
    %v1030 = vadd.f32 %v1028, 1e-05
    %v1031 = vadd.f32 %v1029, 1e-05
    %v1032 = vrsqrt.pop %v1030
    %v1033 = vrsqrt.pop %v1031
    %v1034 = vmul.f32 %v1018, %v1032
    %v1035 = vmul.f32 %v1019, %v1033
    %v1036 = vlaneseq
    %v1037 = vshrl.u32 %v1036, 7
    %v1038 = vsub.s32 6, %v1037
    %v1039 = vrot.slane %v173, %v1038
    %v1040 = vmul.f32 %v1034, %v1039
    %v1041 = vmul.f32 %v1035, %v1039
    %v1042 = vlaneseq
    %v1043 = vshrl.u32 %v1042, 7
    %v1044 = vsub.s32 7, %v1043
    %v1045 = vrot.slane %v173, %v1044
    %v1046 = vadd.f32 %v1040, %v1045
    %v1047 = vadd.f32 %v1041, %v1045
    %s1048 = scalar_lea.vmem [#allocation5], 80
    %v1049 = vld [vmem:[%s1048] sm:$0xf]
    %v1050 = vld [vmem:[%s1048 + $0x4] sm:$0xf]
    %v1051 = vld [vmem:[%s1048 + $0x8] sm:$0xf]
    %v1052 = vld [vmem:[%s1048 + $0xc] sm:$0xf]
    %v1053 = vld [vmem:[%s1048 + $0x10] sm:$0xf]
    %v1054 = vld [vmem:[%s1048 + $0x14] sm:$0xf]
    %v1055 = vld [vmem:[%s1048 + $0x18] sm:$0xf]
    %v1056 = vld [vmem:[%s1048 + $0x1c] sm:$0xf]
    %v1057 = vld [vmem:[%s1048 + $0x20] sm:$0xf]
    %v1058 = vld [vmem:[%s1048 + $0x24] sm:$0xf]
    %v1059 = vld [vmem:[%s1048 + $0x28] sm:$0xf]
    %v1060 = vld [vmem:[%s1048 + $0x2c] sm:$0xf]
    %v1061 = vld [vmem:[%s1048 + $0x30] sm:$0xf]
    %v1062 = vld [vmem:[%s1048 + $0x34] sm:$0xf]
    %v1063 = vld [vmem:[%s1048 + $0x38] sm:$0xf]
    %v1064 = vld [vmem:[%s1048 + $0x3c] sm:$0xf]
    %v1065 = vld [vmem:[%s1048 + $0x40] sm:$0xf]
    %v1066 = vld [vmem:[%s1048 + $0x44] sm:$0xf]
    %v1067 = vld [vmem:[%s1048 + $0x48] sm:$0xf]
    %v1068 = vld [vmem:[%s1048 + $0x4c] sm:$0xf]
    %s1069 = scalar_lea.vmem %s4, 8
    %v1070 = vld [vmem:[%s1069] sm:$0xff]
    %v1071 = vpack.c.bf16 %v1047, %v1046
    %v1072 = vlaneseq
    %v1073 = vshrl.u32 %v1072, 7
    %v1074 = vsub.s32 0, %v1073
    %v1075 = vrot.slane %v1070, %v1074
    %v1080 = vunpack.c.l.b16 %v1049
    %v1081 = vunpack.c.l.b16 %v1050
    %v1082 = vunpack.c.l.b16 %v1051
    %v1083 = vunpack.c.l.b16 %v1052
    %v1084 = vpack.c.b16 %v1081, %v1080
    %v1085 = vpack.c.b16 %v1083, %v1082
    %v1089 = vsel %vm191, %v1071, 0
    %1091 = vmatprep.subr.bf16.mxu0 0
    %1092 = vmatpush1.bf16.msra.mxu0 %v1084
    %1093 = vmatprep.subr.bf16.mxu0 0
    %1094 = vmatpush1.bf16.msra.mxu0 %v1085
    %1095 = vmatprep.subr.bf16.mxu0 0
    %1096 = vmatpush1.bf16.msra.mxu0 0
    %1097 = vmatprep.subr.bf16.mxu0 0
    %1098 = vmatpush1.bf16.msra.mxu0 0
    %1099 = vmatprep.subr.bf16.mxu0 0
    %1100 = vmatpush1.bf16.msra.mxu0 0
    %1101 = vmatprep.subr.bf16.mxu0 0
    %1102 = vmatpush1.bf16.msra.mxu0 0
    %1103 = vmatprep.subr.bf16.mxu0 0
    %1104 = vmatpush1.bf16.msra.mxu0 0
    %1105 = vmatprep.subr.bf16.mxu0 0
    %1106 = vmatpush1.bf16.msra.mxu0 0
    %1107 = vmatprep.subr.bf16.mxu0 0
    %1108 = vmatpush1.bf16.msra.mxu0 0
    %1109 = vmatprep.subr.bf16.mxu0 0
    %1110 = vmatpush1.bf16.msra.mxu0 0
    %1111 = vmatprep.subr.bf16.mxu0 0
    %1112 = vmatpush1.bf16.msra.mxu0 0
    %1113 = vmatprep.subr.bf16.mxu0 0
    %1114 = vmatpush1.bf16.msra.mxu0 0
    %1115 = vmatprep.subr.bf16.mxu0 0
    %1116 = vmatpush1.bf16.msra.mxu0 0
    %1117 = vmatprep.subr.bf16.mxu0 0
    %1118 = vmatpush1.bf16.msra.mxu0 0
    %1119 = vmatprep.subr.bf16.mxu0 0
    %1120 = vmatpush1.bf16.msra.mxu0 0
    %1121 = vmatprep.subr.bf16.mxu0 0
    %1122 = vmatpush1.bf16.msra.mxu0 0
    %1123 = vmatprep.mubr.bf16.mxu0 0
    %1124 = vmatmul.mubr.bf16.gmra.mrb[0].mxu0 %v1089
    %v1125 = vpop.f32.mrb[0].mxu0
    %v1126 = vadd.f32 %v1075, %v1125
    %v1127 = vpop.f32.mrb[0].mxu0
    %v1128 = vpop.f32.mrb[0].mxu0
    %v1129 = vadd.f32 %v1075, %v1128
    %v1130 = vpop.f32.mrb[0].mxu0
    %1131 = vdwg.mxu0
    %v1132 = vpack.c.bf16 %v1129, %v1126
    %1134 = vrot.lane.b32.xlu0 %v1132, 96
    %v1135 = vpop.permute.xlu0 %1134
    %v1137 = vsel %vm240, %v1132, 0
    %v1140 = vsel %vm240, %v1135, 0
    %1142 = vmatprep.subr.bf16.mxu0 0
    %1143 = vmatpush1.bf16.xpose.msra.mxu0 %v1140
    %1144 = vmatprep.subr.bf16.mxu0 0
    %1145 = vmatpush1.bf16.xpose.msra.mxu0 0
    %1146 = vmatprep.subr.bf16.mxu0 0
    %1147 = vmatpush1.bf16.xpose.msra.mxu0 0
    %1148 = vmatprep.subr.bf16.mxu0 0
    %1149 = vmatpush1.bf16.xpose.msra.mxu0 0
    %1150 = vmatprep.subr.bf16.mxu0 0
    %1151 = vmatpush1.bf16.xpose.msra.mxu0 0
    %1152 = vmatprep.subr.bf16.mxu0 0
    %1153 = vmatpush1.bf16.xpose.msra.mxu0 0
    %1154 = vmatprep.subr.bf16.mxu0 0
    %1155 = vmatpush1.bf16.xpose.msra.mxu0 0
    %1156 = vmatprep.subr.bf16.mxu0 0
    %1157 = vmatpush1.bf16.xpose.msra.mxu0 0
    %1158 = vmatprep.subr.bf16.mxu0 0
    %1159 = vmatpush1.bf16.xpose.msra.mxu0 0
    %1160 = vmatprep.subr.bf16.mxu0 0
    %1161 = vmatpush1.bf16.xpose.msra.mxu0 0
    %1162 = vmatprep.subr.bf16.mxu0 0
    %1163 = vmatpush1.bf16.xpose.msra.mxu0 0
    %1164 = vmatprep.subr.bf16.mxu0 0
    %1165 = vmatpush1.bf16.xpose.msra.mxu0 0
    %1166 = vmatprep.subr.bf16.mxu0 0
    %1167 = vmatpush1.bf16.xpose.msra.mxu0 0
    %1168 = vmatprep.subr.bf16.mxu0 0
    %1169 = vmatpush1.bf16.xpose.msra.mxu0 0
    %1170 = vmatprep.subr.bf16.mxu0 0
    %1171 = vmatpush1.bf16.xpose.msra.mxu0 0
    %1172 = vmatprep.subr.bf16.mxu0 0
    %1173 = vmatpush1.bf16.xpose.msra.mxu0 0
    %1174 = vmatprep.mubr.bf16.mxu0 0
    %1175 = vmatmul.mubr.bf16.gmra.mrb[0].mxu0 %v1137
    %v1176 = vpop.f32.mrb[0].mxu0
    %v1177 = vadd.f32 %v151, %v1176
    %v1178 = vpop.f32.mrb[0].mxu0
    %v1179 = vpop.f32.mrb[0].mxu0
    %v1180 = vadd.f32 %v152, %v1179
    %v1181 = vpop.f32.mrb[0].mxu0
    %1182 = vdwg.mxu0
    %v1183 = vsel %vm288, %v1177, -inf
    %1184 = vmax.xlane.f32.xlu0 %v1183
    %v1185 = vpop.xlane.xlu0 %1184
    %v1186 = vsel %vm288, %v1180, -inf
    %1187 = vmax.xlane.f32.xlu0 %v1186
    %v1188 = vpop.xlane.xlu0 %1187
    %v1189 = vsub.f32 %v1177, %v1185
    %v1190 = vsub.f32 %v1180, %v1188
    %v1191 = vmul.f32 %v1189, 1.442695
    %v1192 = vpow.pop %v1191
    %v1193 = vmul.f32 %v1190, 1.442695
    %v1194 = vpow.pop %v1193
    %v1195 = vsel %vm288, %v1192, 0.0
    %1196 = vadd.xlane.f32.xlu0 %v1195
    %v1197 = vpop.xlane.xlu0 %1196
    %v1198 = vsel %vm288, %v1194, 0.0
    %1199 = vadd.xlane.f32.xlu0 %v1198
    %v1200 = vpop.xlane.xlu0 %1199
    %v1201 = vrcp.pop %v1197
    %v1202 = vrcp.pop %v1200
    %v1203 = vmul.f32 %v1192, %v1201
    %v1204 = vmul.f32 %v1194, %v1202
    %v1205 = vpack.c.bf16 %v1204, %v1203
    %1206 = vrot.lane.b32.xlu0 %v1132, 64
    %v1207 = vpop.permute.xlu0 %1206
    %v1210 = vsel %vm288, %v1205, 0
    %1212 = vmatprep.subr.bf16.mxu0 0
    %1213 = vmatpush1.bf16.msra.mxu0 %v1207
    %1214 = vmatprep.subr.bf16.mxu0 0
    %1215 = vmatpush1.bf16.msra.mxu0 0
    %1216 = vmatprep.subr.bf16.mxu0 0
    %1217 = vmatpush1.bf16.msra.mxu0 0
    %1218 = vmatprep.subr.bf16.mxu0 0
    %1219 = vmatpush1.bf16.msra.mxu0 0
    %1220 = vmatprep.subr.bf16.mxu0 0
    %1221 = vmatpush1.bf16.msra.mxu0 0
    %1222 = vmatprep.subr.bf16.mxu0 0
    %1223 = vmatpush1.bf16.msra.mxu0 0
    %1224 = vmatprep.subr.bf16.mxu0 0
    %1225 = vmatpush1.bf16.msra.mxu0 0
    %1226 = vmatprep.subr.bf16.mxu0 0
    %1227 = vmatpush1.bf16.msra.mxu0 0
    %1228 = vmatprep.subr.bf16.mxu0 0
    %1229 = vmatpush1.bf16.msra.mxu0 0
    %1230 = vmatprep.subr.bf16.mxu0 0
    %1231 = vmatpush1.bf16.msra.mxu0 0
    %1232 = vmatprep.subr.bf16.mxu0 0
    %1233 = vmatpush1.bf16.msra.mxu0 0
    %1234 = vmatprep.subr.bf16.mxu0 0
    %1235 = vmatpush1.bf16.msra.mxu0 0
    %1236 = vmatprep.subr.bf16.mxu0 0
    %1237 = vmatpush1.bf16.msra.mxu0 0
    %1238 = vmatprep.subr.bf16.mxu0 0
    %1239 = vmatpush1.bf16.msra.mxu0 0
    %1240 = vmatprep.subr.bf16.mxu0 0
    %1241 = vmatpush1.bf16.msra.mxu0 0
    %1242 = vmatprep.subr.bf16.mxu0 0
    %1243 = vmatpush1.bf16.msra.mxu0 0
    %1244 = vmatprep.mubr.bf16.mxu0 0
    %1245 = vmatmul.mubr.bf16.gmra.mrb[0].mxu0 %v1210
    %v1246 = vpop.f32.mrb[0].mxu0
    %v1247 = vadd.f32 0.0, %v1246
    %v1248 = vpop.f32.mrb[0].mxu0
    %v1249 = vpop.f32.mrb[0].mxu0
    %v1250 = vadd.f32 0.0, %v1249
    %v1251 = vpop.f32.mrb[0].mxu0
    %1252 = vdwg.mxu0
    %1253 = vrot.lane.b32.xlu0 %v1132, 120
    %v1254 = vpop.permute.xlu0 %1253
    %1255 = vrot.lane.b32.xlu0 %v1132, 88
    %v1256 = vpop.permute.xlu0 %1255
    %v1258 = vsel %vm240, %v1254, 0
    %v1261 = vsel %vm240, %v1256, 0
    %1263 = vmatprep.subr.bf16.mxu0 0
    %1264 = vmatpush1.bf16.xpose.msra.mxu0 %v1261
    %1265 = vmatprep.subr.bf16.mxu0 0
    %1266 = vmatpush1.bf16.xpose.msra.mxu0 0
    %1267 = vmatprep.subr.bf16.mxu0 0
    %1268 = vmatpush1.bf16.xpose.msra.mxu0 0
    %1269 = vmatprep.subr.bf16.mxu0 0
    %1270 = vmatpush1.bf16.xpose.msra.mxu0 0
    %1271 = vmatprep.subr.bf16.mxu0 0
    %1272 = vmatpush1.bf16.xpose.msra.mxu0 0
    %1273 = vmatprep.subr.bf16.mxu0 0
    %1274 = vmatpush1.bf16.xpose.msra.mxu0 0
    %1275 = vmatprep.subr.bf16.mxu0 0
    %1276 = vmatpush1.bf16.xpose.msra.mxu0 0
    %1277 = vmatprep.subr.bf16.mxu0 0
    %1278 = vmatpush1.bf16.xpose.msra.mxu0 0
    %1279 = vmatprep.subr.bf16.mxu0 0
    %1280 = vmatpush1.bf16.xpose.msra.mxu0 0
    %1281 = vmatprep.subr.bf16.mxu0 0
    %1282 = vmatpush1.bf16.xpose.msra.mxu0 0
    %1283 = vmatprep.subr.bf16.mxu0 0
    %1284 = vmatpush1.bf16.xpose.msra.mxu0 0
    %1285 = vmatprep.subr.bf16.mxu0 0
    %1286 = vmatpush1.bf16.xpose.msra.mxu0 0
    %1287 = vmatprep.subr.bf16.mxu0 0
    %1288 = vmatpush1.bf16.xpose.msra.mxu0 0
    %1289 = vmatprep.subr.bf16.mxu0 0
    %1290 = vmatpush1.bf16.xpose.msra.mxu0 0
    %1291 = vmatprep.subr.bf16.mxu0 0
    %1292 = vmatpush1.bf16.xpose.msra.mxu0 0
    %1293 = vmatprep.subr.bf16.mxu0 0
    %1294 = vmatpush1.bf16.xpose.msra.mxu0 0
    %1295 = vmatprep.mubr.bf16.mxu0 0
    %1296 = vmatmul.mubr.bf16.gmra.mrb[0].mxu0 %v1258
    %v1297 = vpop.f32.mrb[0].mxu0
    %v1298 = vadd.f32 %v151, %v1297
    %v1299 = vpop.f32.mrb[0].mxu0
    %v1300 = vpop.f32.mrb[0].mxu0
    %v1301 = vadd.f32 %v152, %v1300
    %v1302 = vpop.f32.mrb[0].mxu0
    %1303 = vdwg.mxu0
    %v1304 = vsel %vm288, %v1298, -inf
    %1305 = vmax.xlane.f32.xlu0 %v1304
    %v1306 = vpop.xlane.xlu0 %1305
    %v1307 = vsel %vm288, %v1301, -inf
    %1308 = vmax.xlane.f32.xlu0 %v1307
    %v1309 = vpop.xlane.xlu0 %1308
    %v1310 = vsub.f32 %v1298, %v1306
    %v1311 = vsub.f32 %v1301, %v1309
    %v1312 = vmul.f32 %v1310, 1.442695
    %v1313 = vpow.pop %v1312
    %v1314 = vmul.f32 %v1311, 1.442695
    %v1315 = vpow.pop %v1314
    %v1316 = vsel %vm288, %v1313, 0.0
    %1317 = vadd.xlane.f32.xlu0 %v1316
    %v1318 = vpop.xlane.xlu0 %1317
    %v1319 = vsel %vm288, %v1315, 0.0
    %1320 = vadd.xlane.f32.xlu0 %v1319
    %v1321 = vpop.xlane.xlu0 %1320
    %v1322 = vrcp.pop %v1318
    %v1323 = vrcp.pop %v1321
    %v1324 = vmul.f32 %v1313, %v1322
    %v1325 = vmul.f32 %v1315, %v1323
    %v1326 = vpack.c.bf16 %v1325, %v1324
    %1327 = vrot.lane.b32.xlu0 %v1132, 56
    %v1328 = vpop.permute.xlu0 %1327
    %v1331 = vsel %vm288, %v1326, 0
    %1333 = vmatprep.subr.bf16.mxu0 0
    %1334 = vmatpush1.bf16.msra.mxu0 %v1328
    %1335 = vmatprep.subr.bf16.mxu0 0
    %1336 = vmatpush1.bf16.msra.mxu0 0
    %1337 = vmatprep.subr.bf16.mxu0 0
    %1338 = vmatpush1.bf16.msra.mxu0 0
    %1339 = vmatprep.subr.bf16.mxu0 0
    %1340 = vmatpush1.bf16.msra.mxu0 0
    %1341 = vmatprep.subr.bf16.mxu0 0
    %1342 = vmatpush1.bf16.msra.mxu0 0
    %1343 = vmatprep.subr.bf16.mxu0 0
    %1344 = vmatpush1.bf16.msra.mxu0 0
    %1345 = vmatprep.subr.bf16.mxu0 0
    %1346 = vmatpush1.bf16.msra.mxu0 0
    %1347 = vmatprep.subr.bf16.mxu0 0
    %1348 = vmatpush1.bf16.msra.mxu0 0
    %1349 = vmatprep.subr.bf16.mxu0 0
    %1350 = vmatpush1.bf16.msra.mxu0 0
    %1351 = vmatprep.subr.bf16.mxu0 0
    %1352 = vmatpush1.bf16.msra.mxu0 0
    %1353 = vmatprep.subr.bf16.mxu0 0
    %1354 = vmatpush1.bf16.msra.mxu0 0
    %1355 = vmatprep.subr.bf16.mxu0 0
    %1356 = vmatpush1.bf16.msra.mxu0 0
    %1357 = vmatprep.subr.bf16.mxu0 0
    %1358 = vmatpush1.bf16.msra.mxu0 0
    %1359 = vmatprep.subr.bf16.mxu0 0
    %1360 = vmatpush1.bf16.msra.mxu0 0
    %1361 = vmatprep.subr.bf16.mxu0 0
    %1362 = vmatpush1.bf16.msra.mxu0 0
    %1363 = vmatprep.subr.bf16.mxu0 0
    %1364 = vmatpush1.bf16.msra.mxu0 0
    %1365 = vmatprep.mubr.bf16.mxu0 0
    %1366 = vmatmul.mubr.bf16.gmra.mrb[0].mxu0 %v1331
    %v1367 = vpop.f32.mrb[0].mxu0
    %v1368 = vadd.f32 0.0, %v1367
    %v1369 = vpop.f32.mrb[0].mxu0
    %v1370 = vpop.f32.mrb[0].mxu0
    %v1371 = vadd.f32 0.0, %v1370
    %v1372 = vpop.f32.mrb[0].mxu0
    %1373 = vdwg.mxu0
    %1374 = vrot.lane.b32.xlu0 %v1132, 112
    %v1375 = vpop.permute.xlu0 %1374
    %1376 = vrot.lane.b32.xlu0 %v1132, 80
    %v1377 = vpop.permute.xlu0 %1376
    %v1379 = vsel %vm240, %v1375, 0
    %v1382 = vsel %vm240, %v1377, 0
    %1384 = vmatprep.subr.bf16.mxu0 0
    %1385 = vmatpush1.bf16.xpose.msra.mxu0 %v1382
    %1386 = vmatprep.subr.bf16.mxu0 0
    %1387 = vmatpush1.bf16.xpose.msra.mxu0 0
    %1388 = vmatprep.subr.bf16.mxu0 0
    %1389 = vmatpush1.bf16.xpose.msra.mxu0 0
    %1390 = vmatprep.subr.bf16.mxu0 0
    %1391 = vmatpush1.bf16.xpose.msra.mxu0 0
    %1392 = vmatprep.subr.bf16.mxu0 0
    %1393 = vmatpush1.bf16.xpose.msra.mxu0 0
    %1394 = vmatprep.subr.bf16.mxu0 0
    %1395 = vmatpush1.bf16.xpose.msra.mxu0 0
    %1396 = vmatprep.subr.bf16.mxu0 0
    %1397 = vmatpush1.bf16.xpose.msra.mxu0 0
    %1398 = vmatprep.subr.bf16.mxu0 0
    %1399 = vmatpush1.bf16.xpose.msra.mxu0 0
    %1400 = vmatprep.subr.bf16.mxu0 0
    %1401 = vmatpush1.bf16.xpose.msra.mxu0 0
    %1402 = vmatprep.subr.bf16.mxu0 0
    %1403 = vmatpush1.bf16.xpose.msra.mxu0 0
    %1404 = vmatprep.subr.bf16.mxu0 0
    %1405 = vmatpush1.bf16.xpose.msra.mxu0 0
    %1406 = vmatprep.subr.bf16.mxu0 0
    %1407 = vmatpush1.bf16.xpose.msra.mxu0 0
    %1408 = vmatprep.subr.bf16.mxu0 0
    %1409 = vmatpush1.bf16.xpose.msra.mxu0 0
    %1410 = vmatprep.subr.bf16.mxu0 0
    %1411 = vmatpush1.bf16.xpose.msra.mxu0 0
    %1412 = vmatprep.subr.bf16.mxu0 0
    %1413 = vmatpush1.bf16.xpose.msra.mxu0 0
    %1414 = vmatprep.subr.bf16.mxu0 0
    %1415 = vmatpush1.bf16.xpose.msra.mxu0 0
    %1416 = vmatprep.mubr.bf16.mxu0 0
    %1417 = vmatmul.mubr.bf16.gmra.mrb[0].mxu0 %v1379
    %v1418 = vpop.f32.mrb[0].mxu0
    %v1419 = vadd.f32 %v151, %v1418
    %v1420 = vpop.f32.mrb[0].mxu0
    %v1421 = vpop.f32.mrb[0].mxu0
    %v1422 = vadd.f32 %v152, %v1421
    %v1423 = vpop.f32.mrb[0].mxu0
    %1424 = vdwg.mxu0
    %v1425 = vsel %vm288, %v1419, -inf
    %1426 = vmax.xlane.f32.xlu0 %v1425
    %v1427 = vpop.xlane.xlu0 %1426
    %v1428 = vsel %vm288, %v1422, -inf
    %1429 = vmax.xlane.f32.xlu0 %v1428
    %v1430 = vpop.xlane.xlu0 %1429
    %v1431 = vsub.f32 %v1419, %v1427
    %v1432 = vsub.f32 %v1422, %v1430
    %v1433 = vmul.f32 %v1431, 1.442695
    %v1434 = vpow.pop %v1433
    %v1435 = vmul.f32 %v1432, 1.442695
    %v1436 = vpow.pop %v1435
    %v1437 = vsel %vm288, %v1434, 0.0
    %1438 = vadd.xlane.f32.xlu0 %v1437
    %v1439 = vpop.xlane.xlu0 %1438
    %v1440 = vsel %vm288, %v1436, 0.0
    %1441 = vadd.xlane.f32.xlu0 %v1440
    %v1442 = vpop.xlane.xlu0 %1441
    %v1443 = vrcp.pop %v1439
    %v1444 = vrcp.pop %v1442
    %v1445 = vmul.f32 %v1434, %v1443
    %v1446 = vmul.f32 %v1436, %v1444
    %v1447 = vpack.c.bf16 %v1446, %v1445
    %1448 = vrot.lane.b32.xlu0 %v1132, 48
    %v1449 = vpop.permute.xlu0 %1448
    %v1452 = vsel %vm288, %v1447, 0
    %1454 = vmatprep.subr.bf16.mxu0 0
    %1455 = vmatpush1.bf16.msra.mxu0 %v1449
    %1456 = vmatprep.subr.bf16.mxu0 0
    %1457 = vmatpush1.bf16.msra.mxu0 0
    %1458 = vmatprep.subr.bf16.mxu0 0
    %1459 = vmatpush1.bf16.msra.mxu0 0
    %1460 = vmatprep.subr.bf16.mxu0 0
    %1461 = vmatpush1.bf16.msra.mxu0 0
    %1462 = vmatprep.subr.bf16.mxu0 0
    %1463 = vmatpush1.bf16.msra.mxu0 0
    %1464 = vmatprep.subr.bf16.mxu0 0
    %1465 = vmatpush1.bf16.msra.mxu0 0
    %1466 = vmatprep.subr.bf16.mxu0 0
    %1467 = vmatpush1.bf16.msra.mxu0 0
    %1468 = vmatprep.subr.bf16.mxu0 0
    %1469 = vmatpush1.bf16.msra.mxu0 0
    %1470 = vmatprep.subr.bf16.mxu0 0
    %1471 = vmatpush1.bf16.msra.mxu0 0
    %1472 = vmatprep.subr.bf16.mxu0 0
    %1473 = vmatpush1.bf16.msra.mxu0 0
    %1474 = vmatprep.subr.bf16.mxu0 0
    %1475 = vmatpush1.bf16.msra.mxu0 0
    %1476 = vmatprep.subr.bf16.mxu0 0
    %1477 = vmatpush1.bf16.msra.mxu0 0
    %1478 = vmatprep.subr.bf16.mxu0 0
    %1479 = vmatpush1.bf16.msra.mxu0 0
    %1480 = vmatprep.subr.bf16.mxu0 0
    %1481 = vmatpush1.bf16.msra.mxu0 0
    %1482 = vmatprep.subr.bf16.mxu0 0
    %1483 = vmatpush1.bf16.msra.mxu0 0
    %1484 = vmatprep.subr.bf16.mxu0 0
    %1485 = vmatpush1.bf16.msra.mxu0 0
    %1486 = vmatprep.mubr.bf16.mxu0 0
    %1487 = vmatmul.mubr.bf16.gmra.mrb[0].mxu0 %v1452
    %v1488 = vpop.f32.mrb[0].mxu0
    %v1489 = vadd.f32 0.0, %v1488
    %v1490 = vpop.f32.mrb[0].mxu0
    %v1491 = vpop.f32.mrb[0].mxu0
    %v1492 = vadd.f32 0.0, %v1491
    %v1493 = vpop.f32.mrb[0].mxu0
    %1494 = vdwg.mxu0
    %1495 = vrot.lane.b32.xlu0 %v1132, 104
    %v1496 = vpop.permute.xlu0 %1495
    %1497 = vrot.lane.b32.xlu0 %v1132, 72
    %v1498 = vpop.permute.xlu0 %1497
    %v1500 = vsel %vm240, %v1496, 0
    %v1503 = vsel %vm240, %v1498, 0
    %1505 = vmatprep.subr.bf16.mxu0 0
    %1506 = vmatpush1.bf16.xpose.msra.mxu0 %v1503
    %1507 = vmatprep.subr.bf16.mxu0 0
    %1508 = vmatpush1.bf16.xpose.msra.mxu0 0
    %1509 = vmatprep.subr.bf16.mxu0 0
    %1510 = vmatpush1.bf16.xpose.msra.mxu0 0
    %1511 = vmatprep.subr.bf16.mxu0 0
    %1512 = vmatpush1.bf16.xpose.msra.mxu0 0
    %1513 = vmatprep.subr.bf16.mxu0 0
    %1514 = vmatpush1.bf16.xpose.msra.mxu0 0
    %1515 = vmatprep.subr.bf16.mxu0 0
    %1516 = vmatpush1.bf16.xpose.msra.mxu0 0
    %1517 = vmatprep.subr.bf16.mxu0 0
    %1518 = vmatpush1.bf16.xpose.msra.mxu0 0
    %1519 = vmatprep.subr.bf16.mxu0 0
    %1520 = vmatpush1.bf16.xpose.msra.mxu0 0
    %1521 = vmatprep.subr.bf16.mxu0 0
    %1522 = vmatpush1.bf16.xpose.msra.mxu0 0
    %1523 = vmatprep.subr.bf16.mxu0 0
    %1524 = vmatpush1.bf16.xpose.msra.mxu0 0
    %1525 = vmatprep.subr.bf16.mxu0 0
    %1526 = vmatpush1.bf16.xpose.msra.mxu0 0
    %1527 = vmatprep.subr.bf16.mxu0 0
    %1528 = vmatpush1.bf16.xpose.msra.mxu0 0
    %1529 = vmatprep.subr.bf16.mxu0 0
    %1530 = vmatpush1.bf16.xpose.msra.mxu0 0
    %1531 = vmatprep.subr.bf16.mxu0 0
    %1532 = vmatpush1.bf16.xpose.msra.mxu0 0
    %1533 = vmatprep.subr.bf16.mxu0 0
    %1534 = vmatpush1.bf16.xpose.msra.mxu0 0
    %1535 = vmatprep.subr.bf16.mxu0 0
    %1536 = vmatpush1.bf16.xpose.msra.mxu0 0
    %1537 = vmatprep.mubr.bf16.mxu0 0
    %1538 = vmatmul.mubr.bf16.gmra.mrb[0].mxu0 %v1500
    %v1539 = vpop.f32.mrb[0].mxu0
    %v1540 = vadd.f32 %v151, %v1539
    %v1541 = vpop.f32.mrb[0].mxu0
    %v1542 = vpop.f32.mrb[0].mxu0
    %v1543 = vadd.f32 %v152, %v1542
    %v1544 = vpop.f32.mrb[0].mxu0
    %1545 = vdwg.mxu0
    %v1546 = vsel %vm288, %v1540, -inf
    %1547 = vmax.xlane.f32.xlu0 %v1546
    %v1548 = vpop.xlane.xlu0 %1547
    %v1549 = vsel %vm288, %v1543, -inf
    %1550 = vmax.xlane.f32.xlu0 %v1549
    %v1551 = vpop.xlane.xlu0 %1550
    %v1552 = vsub.f32 %v1540, %v1548
    %v1553 = vsub.f32 %v1543, %v1551
    %v1554 = vmul.f32 %v1552, 1.442695
    %v1555 = vpow.pop %v1554
    %v1556 = vmul.f32 %v1553, 1.442695
    %v1557 = vpow.pop %v1556
    %v1558 = vsel %vm288, %v1555, 0.0
    %1559 = vadd.xlane.f32.xlu0 %v1558
    %v1560 = vpop.xlane.xlu0 %1559
    %v1561 = vsel %vm288, %v1557, 0.0
    %1562 = vadd.xlane.f32.xlu0 %v1561
    %v1563 = vpop.xlane.xlu0 %1562
    %v1564 = vrcp.pop %v1560
    %v1565 = vrcp.pop %v1563
    %v1566 = vmul.f32 %v1555, %v1564
    %v1567 = vmul.f32 %v1557, %v1565
    %v1568 = vpack.c.bf16 %v1567, %v1566
    %1569 = vrot.lane.b32.xlu0 %v1132, 40
    %v1570 = vpop.permute.xlu0 %1569
    %v1573 = vsel %vm288, %v1568, 0
    %1575 = vmatprep.subr.bf16.mxu0 0
    %1576 = vmatpush1.bf16.msra.mxu0 %v1570
    %1577 = vmatprep.subr.bf16.mxu0 0
    %1578 = vmatpush1.bf16.msra.mxu0 0
    %1579 = vmatprep.subr.bf16.mxu0 0
    %1580 = vmatpush1.bf16.msra.mxu0 0
    %1581 = vmatprep.subr.bf16.mxu0 0
    %1582 = vmatpush1.bf16.msra.mxu0 0
    %1583 = vmatprep.subr.bf16.mxu0 0
    %1584 = vmatpush1.bf16.msra.mxu0 0
    %1585 = vmatprep.subr.bf16.mxu0 0
    %1586 = vmatpush1.bf16.msra.mxu0 0
    %1587 = vmatprep.subr.bf16.mxu0 0
    %1588 = vmatpush1.bf16.msra.mxu0 0
    %1589 = vmatprep.subr.bf16.mxu0 0
    %1590 = vmatpush1.bf16.msra.mxu0 0
    %1591 = vmatprep.subr.bf16.mxu0 0
    %1592 = vmatpush1.bf16.msra.mxu0 0
    %1593 = vmatprep.subr.bf16.mxu0 0
    %1594 = vmatpush1.bf16.msra.mxu0 0
    %1595 = vmatprep.subr.bf16.mxu0 0
    %1596 = vmatpush1.bf16.msra.mxu0 0
    %1597 = vmatprep.subr.bf16.mxu0 0
    %1598 = vmatpush1.bf16.msra.mxu0 0
    %1599 = vmatprep.subr.bf16.mxu0 0
    %1600 = vmatpush1.bf16.msra.mxu0 0
    %1601 = vmatprep.subr.bf16.mxu0 0
    %1602 = vmatpush1.bf16.msra.mxu0 0
    %1603 = vmatprep.subr.bf16.mxu0 0
    %1604 = vmatpush1.bf16.msra.mxu0 0
    %1605 = vmatprep.subr.bf16.mxu0 0
    %1606 = vmatpush1.bf16.msra.mxu0 0
    %1607 = vmatprep.mubr.bf16.mxu0 0
    %1608 = vmatmul.mubr.bf16.gmra.mrb[0].mxu0 %v1573
    %v1609 = vpop.f32.mrb[0].mxu0
    %v1610 = vadd.f32 0.0, %v1609
    %v1611 = vpop.f32.mrb[0].mxu0
    %v1612 = vpop.f32.mrb[0].mxu0
    %v1613 = vadd.f32 0.0, %v1612
    %v1614 = vpop.f32.mrb[0].mxu0
    %1615 = vdwg.mxu0
    %1618 = vrot.lane.b32.xlu0 %v1368, 8
    %v1619 = vpop.permute.xlu0 %1618
    %1620 = vrot.lane.b32.xlu0 %v1371, 8
    %v1621 = vpop.permute.xlu0 %1620
    %1626 = vrot.lane.b32.xlu0 %v1489, 16
    %v1627 = vpop.permute.xlu0 %1626
    %1628 = vrot.lane.b32.xlu0 %v1492, 16
    %v1629 = vpop.permute.xlu0 %1628
    %1634 = vrot.lane.b32.xlu0 %v1610, 24
    %v1635 = vpop.permute.xlu0 %1634
    %1636 = vrot.lane.b32.xlu0 %v1613, 24
    %v1637 = vpop.permute.xlu0 %1636
    %v1640 = vsel %vm240, %v1247, %v1619
    %v1641 = vsel %vm240, %v1250, %v1621
    %v1642 = vsel %vm288, %v1640, %v1627
    %v1643 = vsel %vm288, %v1641, %v1629
    %v1644 = vsel %vm750, %v1642, %v1635
    %v1645 = vsel %vm750, %v1643, %v1637
    %v1646 = vpack.c.bf16 %v1645, %v1644
    %v1647 = vlaneseq
    %v1648 = vshrl.u32 %v1647, 7
    %v1649 = vsub.s32 1, %v1648
    %v1650 = vrot.slane %v1070, %v1649
    %v1655 = vunpack.c.l.b16 %v1065
    %v1656 = vunpack.c.l.b16 %v1066
    %v1657 = vunpack.c.l.b16 %v1067
    %v1658 = vunpack.c.l.b16 %v1068
    %v1659 = vpack.c.b16 %v1656, %v1655
    %v1660 = vpack.c.b16 %v1658, %v1657
    %v1664 = vsel %vm191, %v1646, 0
    %1666 = vmatprep.subr.bf16.mxu0 0
    %1667 = vmatpush1.bf16.msra.mxu0 %v1659
    %1668 = vmatprep.subr.bf16.mxu0 0
    %1669 = vmatpush1.bf16.msra.mxu0 %v1660
    %1670 = vmatprep.subr.bf16.mxu0 0
    %1671 = vmatpush1.bf16.msra.mxu0 0
    %1672 = vmatprep.subr.bf16.mxu0 0
    %1673 = vmatpush1.bf16.msra.mxu0 0
    %1674 = vmatprep.subr.bf16.mxu0 0
    %1675 = vmatpush1.bf16.msra.mxu0 0
    %1676 = vmatprep.subr.bf16.mxu0 0
    %1677 = vmatpush1.bf16.msra.mxu0 0
    %1678 = vmatprep.subr.bf16.mxu0 0
    %1679 = vmatpush1.bf16.msra.mxu0 0
    %1680 = vmatprep.subr.bf16.mxu0 0
    %1681 = vmatpush1.bf16.msra.mxu0 0
    %1682 = vmatprep.subr.bf16.mxu0 0
    %1683 = vmatpush1.bf16.msra.mxu0 0
    %1684 = vmatprep.subr.bf16.mxu0 0
    %1685 = vmatpush1.bf16.msra.mxu0 0
    %1686 = vmatprep.subr.bf16.mxu0 0
    %1687 = vmatpush1.bf16.msra.mxu0 0
    %1688 = vmatprep.subr.bf16.mxu0 0
    %1689 = vmatpush1.bf16.msra.mxu0 0
    %1690 = vmatprep.subr.bf16.mxu0 0
    %1691 = vmatpush1.bf16.msra.mxu0 0
    %1692 = vmatprep.subr.bf16.mxu0 0
    %1693 = vmatpush1.bf16.msra.mxu0 0
    %1694 = vmatprep.subr.bf16.mxu0 0
    %1695 = vmatpush1.bf16.msra.mxu0 0
    %1696 = vmatprep.subr.bf16.mxu0 0
    %1697 = vmatpush1.bf16.msra.mxu0 0
    %1698 = vmatprep.mubr.bf16.mxu0 0
    %1699 = vmatmul.mubr.bf16.gmra.mrb[0].mxu0 %v1664
    %v1700 = vpop.f32.mrb[0].mxu0
    %v1701 = vadd.f32 %v1650, %v1700
    %v1702 = vpop.f32.mrb[0].mxu0
    %v1703 = vpop.f32.mrb[0].mxu0
    %v1704 = vadd.f32 %v1650, %v1703
    %v1705 = vpop.f32.mrb[0].mxu0
    %1706 = vdwg.mxu0
    %v1707 = vadd.f32 %v1046, %v1701
    %v1708 = vadd.f32 %v1047, %v1704
    %v1709 = vsel %vm191, %v1707, 0.0
    %1710 = vadd.xlane.f32.xlu0 %v1709
    %v1711 = vpop.xlane.xlu0 %1710
    %v1712 = vsel %vm191, %v1708, 0.0
    %1713 = vadd.xlane.f32.xlu0 %v1712
    %v1714 = vpop.xlane.xlu0 %1713
    %v1715 = vmul.f32 %v1711, %v822
    %v1716 = vmul.f32 %v1714, %v822
    %v1717 = vsub.f32 %v1707, %v1715
    %v1718 = vsub.f32 %v1708, %v1716
    %v1719 = vmul.f32 %v1717, %v1717
    %v1720 = vmul.f32 %v1718, %v1718
    %v1721 = vsel %vm191, %v1719, 0.0
    %1722 = vadd.xlane.f32.xlu0 %v1721
    %v1723 = vpop.xlane.xlu0 %1722
    %v1724 = vsel %vm191, %v1720, 0.0
    %1725 = vadd.xlane.f32.xlu0 %v1724
    %v1726 = vpop.xlane.xlu0 %1725
    %v1727 = vmul.f32 %v1723, %v822
    %v1728 = vmul.f32 %v1726, %v822
    %v1729 = vadd.f32 %v1727, 1e-05
    %v1730 = vadd.f32 %v1728, 1e-05
    %v1731 = vrsqrt.pop %v1729
    %v1732 = vrsqrt.pop %v1730
    %v1733 = vmul.f32 %v1717, %v1731
    %v1734 = vmul.f32 %v1718, %v1732
    %v1735 = vlaneseq
    %v1736 = vshrl.u32 %v1735, 7
    %v1737 = vsub.s32 2, %v1736
    %v1738 = vrot.slane %v1070, %v1737
    %v1739 = vmul.f32 %v1733, %v1738
    %v1740 = vmul.f32 %v1734, %v1738
    %v1741 = vlaneseq
    %v1742 = vshrl.u32 %v1741, 7
    %v1743 = vsub.s32 3, %v1742
    %v1744 = vrot.slane %v1070, %v1743
    %v1745 = vadd.f32 %v1739, %v1744
    %v1746 = vadd.f32 %v1740, %v1744
    %v1747 = vpack.c.bf16 %v1746, %v1745
    %v1748 = vlaneseq
    %v1749 = vshrl.u32 %v1748, 7
    %v1750 = vsub.s32 4, %v1749
    %v1751 = vrot.slane %v1070, %v1750
    %v1756 = vunpack.c.l.b16 %v1053
    %v1757 = vunpack.c.l.b16 %v1054
    %v1758 = vunpack.c.l.b16 %v1055
    %v1759 = vunpack.c.l.b16 %v1056
    %v1760 = vpack.c.b16 %v1757, %v1756
    %v1761 = vpack.c.b16 %v1759, %v1758
    %v1765 = vsel %vm191, %v1747, 0
    %1767 = vmatprep.subr.bf16.mxu0 0
    %1768 = vmatpush1.bf16.msra.mxu0 %v1760
    %1769 = vmatprep.subr.bf16.mxu0 0
    %1770 = vmatpush1.bf16.msra.mxu0 %v1761
    %1771 = vmatprep.subr.bf16.mxu0 0
    %1772 = vmatpush1.bf16.msra.mxu0 0
    %1773 = vmatprep.subr.bf16.mxu0 0
    %1774 = vmatpush1.bf16.msra.mxu0 0
    %1775 = vmatprep.subr.bf16.mxu0 0
    %1776 = vmatpush1.bf16.msra.mxu0 0
    %1777 = vmatprep.subr.bf16.mxu0 0
    %1778 = vmatpush1.bf16.msra.mxu0 0
    %1779 = vmatprep.subr.bf16.mxu0 0
    %1780 = vmatpush1.bf16.msra.mxu0 0
    %1781 = vmatprep.subr.bf16.mxu0 0
    %1782 = vmatpush1.bf16.msra.mxu0 0
    %1783 = vmatprep.subr.bf16.mxu0 0
    %1784 = vmatpush1.bf16.msra.mxu0 0
    %1785 = vmatprep.subr.bf16.mxu0 0
    %1786 = vmatpush1.bf16.msra.mxu0 0
    %1787 = vmatprep.subr.bf16.mxu0 0
    %1788 = vmatpush1.bf16.msra.mxu0 0
    %1789 = vmatprep.subr.bf16.mxu0 0
    %1790 = vmatpush1.bf16.msra.mxu0 0
    %1791 = vmatprep.subr.bf16.mxu0 0
    %1792 = vmatpush1.bf16.msra.mxu0 0
    %1793 = vmatprep.subr.bf16.mxu0 0
    %1794 = vmatpush1.bf16.msra.mxu0 0
    %1795 = vmatprep.subr.bf16.mxu0 0
    %1796 = vmatpush1.bf16.msra.mxu0 0
    %1797 = vmatprep.subr.bf16.mxu0 0
    %1798 = vmatpush1.bf16.msra.mxu0 0
    %1799 = vmatprep.mubr.bf16.mxu0 0
    %1800 = vmatmul.mubr.bf16.gmra.mrb[0].mxu0 %v1765
    %v1801 = vpop.f32.mrb[0].mxu0
    %v1802 = vadd.f32 %v1751, %v1801
    %v1803 = vpop.f32.mrb[0].mxu0
    %v1804 = vpop.f32.mrb[0].mxu0
    %v1805 = vadd.f32 %v1751, %v1804
    %v1806 = vpop.f32.mrb[0].mxu0
    %1807 = vdwg.mxu0
    %v1808 = vmul.f32 %v1802, 0.5
    %v1809 = vmul.f32 %v1805, 0.5
    %v1810 = vmul.f32 %v1802, %v1802
    %v1811 = vmul.f32 %v1805, %v1805
    %v1812 = vmul.f32 %v1802, %v1810
    %v1813 = vmul.f32 %v1805, %v1811
    %v1814 = vmul.f32 %v1812, 0.044715
    %v1815 = vmul.f32 %v1813, 0.044715
    %v1816 = vadd.f32 %v1802, %v1814
    %v1817 = vadd.f32 %v1805, %v1815
    %v1818 = vmul.f32 %v1816, 0.7978846
    %v1819 = vmul.f32 %v1817, 0.7978846
    %v1820 = vtanh.pop %v1818
    %v1821 = vtanh.pop %v1819
    %v1822 = vadd.f32 %v1820, 1.0
    %v1823 = vadd.f32 %v1821, 1.0
    %v1824 = vmul.f32 %v1808, %v1822
    %v1825 = vmul.f32 %v1809, %v1823
    %v1826 = vpack.c.bf16 %v1825, %v1824
    %v1827 = vlaneseq
    %v1828 = vshrl.u32 %v1827, 7
    %v1829 = vsub.s32 5, %v1828
    %v1830 = vrot.slane %v1070, %v1829
    %v1839 = vunpack.c.l.b16 %v1057
    %v1840 = vunpack.c.l.b16 %v1058
    %v1841 = vunpack.c.l.b16 %v1059
    %v1842 = vunpack.c.l.b16 %v1060
    %v1843 = vunpack.c.l.b16 %v1061
    %v1844 = vunpack.c.l.b16 %v1062
    %v1845 = vunpack.c.l.b16 %v1063
    %v1846 = vunpack.c.l.b16 %v1064
    %v1847 = vpack.c.b16 %v1840, %v1839
    %v1848 = vpack.c.b16 %v1842, %v1841
    %v1849 = vpack.c.b16 %v1844, %v1843
    %v1850 = vpack.c.b16 %v1846, %v1845
    %v1856 = vsel %vm963, %v1826, 0
    %1858 = vmatprep.subr.bf16.mxu0 0
    %1859 = vmatpush1.bf16.msra.mxu0 %v1847
    %1860 = vmatprep.subr.bf16.mxu0 0
    %1861 = vmatpush1.bf16.msra.mxu0 %v1848
    %1862 = vmatprep.subr.bf16.mxu0 0
    %1863 = vmatpush1.bf16.msra.mxu0 %v1849
    %1864 = vmatprep.subr.bf16.mxu0 0
    %1865 = vmatpush1.bf16.msra.mxu0 %v1850
    %1866 = vmatprep.subr.bf16.mxu0 0
    %1867 = vmatpush1.bf16.msra.mxu0 0
    %1868 = vmatprep.subr.bf16.mxu0 0
    %1869 = vmatpush1.bf16.msra.mxu0 0
    %1870 = vmatprep.subr.bf16.mxu0 0
    %1871 = vmatpush1.bf16.msra.mxu0 0
    %1872 = vmatprep.subr.bf16.mxu0 0
    %1873 = vmatpush1.bf16.msra.mxu0 0
    %1874 = vmatprep.subr.bf16.mxu0 0
    %1875 = vmatpush1.bf16.msra.mxu0 0
    %1876 = vmatprep.subr.bf16.mxu0 0
    %1877 = vmatpush1.bf16.msra.mxu0 0
    %1878 = vmatprep.subr.bf16.mxu0 0
    %1879 = vmatpush1.bf16.msra.mxu0 0
    %1880 = vmatprep.subr.bf16.mxu0 0
    %1881 = vmatpush1.bf16.msra.mxu0 0
    %1882 = vmatprep.subr.bf16.mxu0 0
    %1883 = vmatpush1.bf16.msra.mxu0 0
    %1884 = vmatprep.subr.bf16.mxu0 0
    %1885 = vmatpush1.bf16.msra.mxu0 0
    %1886 = vmatprep.subr.bf16.mxu0 0
    %1887 = vmatpush1.bf16.msra.mxu0 0
    %1888 = vmatprep.subr.bf16.mxu0 0
    %1889 = vmatpush1.bf16.msra.mxu0 0
    %1890 = vmatprep.mubr.bf16.mxu0 0
    %1891 = vmatmul.mubr.bf16.gmra.mrb[0].mxu0 %v1856
    %v1892 = vpop.f32.mrb[0].mxu0
    %v1893 = vadd.f32 %v1830, %v1892
    %v1894 = vpop.f32.mrb[0].mxu0
    %v1895 = vpop.f32.mrb[0].mxu0
    %v1896 = vadd.f32 %v1830, %v1895
    %v1897 = vpop.f32.mrb[0].mxu0
    %1898 = vdwg.mxu0
    %v1899 = vadd.f32 %v1745, %v1893
    %v1900 = vadd.f32 %v1746, %v1896
    %v1901 = vsel %vm191, %v1899, 0.0
    %1902 = vadd.xlane.f32.xlu0 %v1901
    %v1903 = vpop.xlane.xlu0 %1902
    %v1904 = vsel %vm191, %v1900, 0.0
    %1905 = vadd.xlane.f32.xlu0 %v1904
    %v1906 = vpop.xlane.xlu0 %1905
    %v1907 = vmul.f32 %v1903, %v822
    %v1908 = vmul.f32 %v1906, %v822
    %v1909 = vsub.f32 %v1899, %v1907
    %v1910 = vsub.f32 %v1900, %v1908
    %v1911 = vmul.f32 %v1909, %v1909
    %v1912 = vmul.f32 %v1910, %v1910
    %v1913 = vsel %vm191, %v1911, 0.0
    %1914 = vadd.xlane.f32.xlu0 %v1913
    %v1915 = vpop.xlane.xlu0 %1914
    %v1916 = vsel %vm191, %v1912, 0.0
    %1917 = vadd.xlane.f32.xlu0 %v1916
    %v1918 = vpop.xlane.xlu0 %1917
    %v1919 = vmul.f32 %v1915, %v822
    %v1920 = vmul.f32 %v1918, %v822
    %v1921 = vadd.f32 %v1919, 1e-05
    %v1922 = vadd.f32 %v1920, 1e-05
    %v1923 = vrsqrt.pop %v1921
    %v1924 = vrsqrt.pop %v1922
    %v1925 = vmul.f32 %v1909, %v1923
    %v1926 = vmul.f32 %v1910, %v1924
    %v1927 = vlaneseq
    %v1928 = vshrl.u32 %v1927, 7
    %v1929 = vsub.s32 6, %v1928
    %v1930 = vrot.slane %v1070, %v1929
    %v1931 = vmul.f32 %v1925, %v1930
    %v1932 = vmul.f32 %v1926, %v1930
    %v1933 = vlaneseq
    %v1934 = vshrl.u32 %v1933, 7
    %v1935 = vsub.s32 7, %v1934
    %v1936 = vrot.slane %v1070, %v1935
    %v1937 = vadd.f32 %v1931, %v1936
    %v1938 = vadd.f32 %v1932, %v1936
    %v1940 = vrot.slane %v1938, 7
    %vm1942 = vcmask 1040384
    %v1943 = vsel %vm1942, %v1937, %v1940
    %v1944 = vld [vmem:[#allocation2 + $0x90] sm:$0x1]
    %v1945 = vld [vmem:[#allocation2 + $0x91] sm:$0x1]
    %v1946 = vld [vmem:[#allocation2 + $0x92] sm:$0xff]
    %v1947 = vld [vmem:[#allocation2 + $0x9a] sm:$0xff]
    %v1948 = vld [vmem:[#allocation2 + $0xa2] sm:$0xff]
    %v1949 = vld [vmem:[#allocation2 + $0xaa] sm:$0xff]
    %v1950 = vld [vmem:[#allocation2 + $0xb2] sm:$0x1]
    %vm1951 = vcmask 254976
    %v1952 = vsel %vm1951, %v1943, 0.0
    %1953 = vadd.xlane.f32.xlu0 %v1952
    %v1954 = vpop.xlane.xlu0 %1953
    %v1955 = vmul.f32 %v1954, %v822
    %v1956 = vsub.f32 %v1943, %v1955
    %v1957 = vmul.f32 %v1956, %v1956
    %v1958 = vsel %vm1951, %v1957, 0.0
    %1959 = vadd.xlane.f32.xlu0 %v1958
    %v1960 = vpop.xlane.xlu0 %1959
    %v1961 = vmul.f32 %v1960, %v822
    %v1962 = vadd.f32 %v1961, 1e-05
    %v1963 = vrsqrt.pop %v1962
    %v1964 = vmul.f32 %v1956, %v1963
    %v1965 = vlaneseq
    %v1966 = vshrl.u32 %v1965, 7
    %v1967 = vsub.s32 0, %v1966
    %v1968 = vrot.slane %v1944, %v1967
    %v1969 = vmul.f32 %v1964, %v1968
    %v1970 = vlaneseq
    %v1971 = vshrl.u32 %v1970, 7
    %v1972 = vsub.s32 0, %v1971
    %v1973 = vrot.slane %v1945, %v1972
    %v1974 = vadd.f32 %v1969, %v1973
    %v1975 = vpack.c.bf16 %v1974, %v1974
    %v1976 = vpack.c.bf16 %v1947, %v1946
    %v1977 = vpack.c.bf16 %v1949, %v1948
    %v1978 = vlaneseq
    %v1979 = vshrl.u32 %v1978, 7
    %v1980 = vsub.s32 0, %v1979
    %v1981 = vrot.slane %v1950, %v1980
    %v1983 = vsel %vm191, %v1975, 0
    %1985 = vmatprep.subr.bf16.mxu0 0
    %1986 = vmatpush1.bf16.msra.mxu0 %v1976
    %1987 = vmatprep.subr.bf16.mxu0 0
    %1988 = vmatpush1.bf16.msra.mxu0 %v1977
    %1989 = vmatprep.subr.bf16.mxu0 0
    %1990 = vmatpush1.bf16.msra.mxu0 0
    %1991 = vmatprep.subr.bf16.mxu0 0
    %1992 = vmatpush1.bf16.msra.mxu0 0
    %1993 = vmatprep.subr.bf16.mxu0 0
    %1994 = vmatpush1.bf16.msra.mxu0 0
    %1995 = vmatprep.subr.bf16.mxu0 0
    %1996 = vmatpush1.bf16.msra.mxu0 0
    %1997 = vmatprep.subr.bf16.mxu0 0
    %1998 = vmatpush1.bf16.msra.mxu0 0
    %1999 = vmatprep.subr.bf16.mxu0 0
    %2000 = vmatpush1.bf16.msra.mxu0 0
    %2001 = vmatprep.subr.bf16.mxu0 0
    %2002 = vmatpush1.bf16.msra.mxu0 0
    %2003 = vmatprep.subr.bf16.mxu0 0
    %2004 = vmatpush1.bf16.msra.mxu0 0
    %2005 = vmatprep.subr.bf16.mxu0 0
    %2006 = vmatpush1.bf16.msra.mxu0 0
    %2007 = vmatprep.subr.bf16.mxu0 0
    %2008 = vmatpush1.bf16.msra.mxu0 0
    %2009 = vmatprep.subr.bf16.mxu0 0
    %2010 = vmatpush1.bf16.msra.mxu0 0
    %2011 = vmatprep.subr.bf16.mxu0 0
    %2012 = vmatpush1.bf16.msra.mxu0 0
    %2013 = vmatprep.subr.bf16.mxu0 0
    %2014 = vmatpush1.bf16.msra.mxu0 0
    %2015 = vmatprep.subr.bf16.mxu0 0
    %2016 = vmatpush1.bf16.msra.mxu0 0
    %2017 = vmatprep.mubr.bf16.mxu0 0
    %2018 = vmatmul.mubr.bf16.gmra.mrb[0].mxu0 %v1983
    %v2019 = vpop.f32.mrb[0].mxu0
    %v2020 = vadd.f32 %v1981, %v2019
    %v2021 = vpop.f32.mrb[0].mxu0
    %v2022 = vpop.f32.mrb[0].mxu0
    %v2023 = vpop.f32.mrb[0].mxu0
    %2024 = vdwg.mxu0
    %vm2025 = vcmask 17408
    %2026 = vst.msk [vmem:[#allocation7] sm:$0x3] %vm2025, %v2020
    // Predicated region
    $region30: #{_forward_impl.1} parent=1 // pred_check
      _
    $region31: #{_forward_impl.1} parent=1 // pred_check_branch
      %2028 = sbr.rel (0) target = $region33
    $region32: #{_forward_impl.1} parent=1 // pred_region
      %s2030 = ssub.s32 32, 32
      %2031 = vsyncadd [#allocation4], %s2030
      %s2033 = sshll.u32 [#allocation7], 4
      %s2034 = int_to_ptr.vmem [resolvable:$true] %s2033
      %2036 = dma.vmem_to_hbm [thread:$0]  %s2034, 32, %s5, [#allocation4]
    $region33: #{_forward_impl.1} parent=1 // pred_fallthru
      _
    // Predicated region
    $region34: #{_forward_impl.1} parent=1 // pred_check
      _
    $region35: #{_forward_impl.1} parent=1 // pred_check_branch
      %2038 = sbr.rel (0) target = $region37
    $region36: #{_forward_impl.1} parent=1 // pred_region
      %2039 = dma.done [#allocation4], 32
    $region37: #{_forward_impl.1} parent=1 // pred_fallthru
      _
    %2040 = vsyncpa [#allocation3], 1
    %2041 = vsyncpa [#allocation6], 1
    %2042 = vsyncpa [#allocation4], 1

</llo_original>
